<compile_context>
chip_gen: v7x
topology: tpu7x:2x2x1
jax: 0.10.0
libtpu: 0.0.40
codegen_flags: <defaults>
</compile_context>

<pallas_src>
import functools

import jax
import jax.numpy as jnp
from jax.experimental import pallas as pl
from jax.experimental.pallas import tpu as pltpu

IN_FEATURES = 784
HIDDEN = 512
OUT_FEATURES = 10


def _round_up(a, m):
    return (a + m - 1) // m * m


def _mlp_softmax_kernel(x_ref, w1_ref, b1_ref, w2_ref, b2_ref, o_ref):
    # Cast the streamed activation tile to bf16 in-kernel (VPU work hidden under
    # the x DMA) instead of a separate HBM pad/cast pass in the wrapper.
    x = x_ref[...].astype(jnp.bfloat16)

    # Layer 1: Linear(784 -> 512), bf16 operands, f32 MXU accumulate (K = 784).
    h = jnp.dot(x, w1_ref[...], preferred_element_type=jnp.float32)
    h = jnp.maximum(h + b1_ref[...], 0.0)          # bias + ReLU in f32

    # Layer 2: Linear(512 -> 10), bf16 operands, f32 accumulate.
    logits = jnp.dot(h.astype(jnp.bfloat16), w2_ref[...],
                     preferred_element_type=jnp.float32)
    logits = logits + b2_ref[...]

    # Numerically stable softmax over the 10 classes, all in f32.
    m = jnp.max(logits, axis=1, keepdims=True)
    e = jnp.exp(logits - m)
    denom = jnp.sum(e, axis=1, keepdims=True)
    o_ref[...] = (e * pl.reciprocal(denom, approx=True)).astype(o_ref.dtype)


@functools.partial(jax.jit, static_argnames=("tb",))
def network_forward(x, w1, b1, w2, b2, *, tb=1024):
    """x: (B, C, H, W) with C*H*W == 784 (or already (B, 784)).

    w1: (784, 512), b1: (1, 512), w2: (512, 10), b2: (1, 10).
    Returns softmax probabilities of shape (B, 10), f32.
    """
    B = x.shape[0]
    x2d = x.reshape(B, -1)                          # torch.flatten(input, 1)
    assert x2d.shape[1] == IN_FEATURES

    # ---- batch tile selection (static, shape-only) -------------------------
    Bp8 = _round_up(B, 8)
    tb_eff = tb
    if Bp8 >= 256:
        # v7x has 2 TensorCores: make sure the "parallel" batch axis has at
        # least 2 tiles whenever the batch is big enough (multiple of 128).
        tb_eff = min(tb_eff, _round_up((Bp8 + 1) // 2, 128))
    if B <= tb_eff:
        tb_eff = B        # single block spanning the full batch (full-dim block)
    grid = (pl.cdiv(B, tb_eff),)

    # Only the small weights/biases are touched on the host side; the large
    # activation x is consumed by the kernel unpadded and uncast.
    w1b = w1.astype(jnp.bfloat16)
    w2b = w2.astype(jnp.bfloat16)
    b1f = b1.reshape(1, HIDDEN).astype(jnp.float32)
    b2f = b2.reshape(1, OUT_FEATURES).astype(jnp.float32)

    out = pl.pallas_call(
        _mlp_softmax_kernel,
        out_shape=jax.ShapeDtypeStruct((B, OUT_FEATURES), jnp.float32),
        grid_spec=pltpu.PrefetchScalarGridSpec(
            num_scalar_prefetch=0,
            grid=grid,
            in_specs=[
                pl.BlockSpec((tb_eff, IN_FEATURES), lambda i: (i, 0)),   # x tile (f32)
                pl.BlockSpec((IN_FEATURES, HIDDEN), lambda i: (0, 0)),   # W1 (bf16, resident)
                pl.BlockSpec((1, HIDDEN), lambda i: (0, 0)),             # b1 (f32)
                pl.BlockSpec((HIDDEN, OUT_FEATURES), lambda i: (0, 0)),  # W2 (bf16, resident)
                pl.BlockSpec((1, OUT_FEATURES), lambda i: (0, 0)),       # b2 (f32)
            ],
            out_specs=pl.BlockSpec((tb_eff, OUT_FEATURES), lambda i: (i, 0)),
        ),
        compiler_params=pltpu.CompilerParams(
            dimension_semantics=("parallel",),
            vmem_limit_bytes=32 * 1024 * 1024,
        ),
    )(x2d, w1b, b1f, w2b, b2f)

    return out


def init_params(key):
    """Deterministic init matching PyTorch nn.Linear default:
    U(-1/sqrt(fan_in), 1/sqrt(fan_in)) for both weight and bias."""
    k1, k2, k3, k4 = jax.random.split(key, 4)
    bound1 = 1.0 / (IN_FEATURES ** 0.5)
    bound2 = 1.0 / (HIDDEN ** 0.5)
    w1 = jax.random.uniform(k1, (IN_FEATURES, HIDDEN), jnp.float32, -bound1, bound1)
    b1 = jax.random.uniform(k2, (1, HIDDEN), jnp.float32, -bound1, bound1)
    w2 = jax.random.uniform(k3, (HIDDEN, OUT_FEATURES), jnp.float32, -bound2, bound2)
    b2 = jax.random.uniform(k4, (1, OUT_FEATURES), jnp.float32, -bound2, bound2)
    return w1, b1, w2, b2


if __name__ == "__main__":
    key = jax.random.PRNGKey(0)
    k_x, k_p = jax.random.split(key)

    # Small MNIST-like batch: (B=8, C=1, H=28, W=28) -> flatten -> 784 features
    x = jax.random.normal(k_x, (8, 1, 28, 28), dtype=jnp.float32)
    w1, b1, w2, b2 = init_params(k_p)

    out = network_forward(x, w1, b1, w2, b2)
    out = jax.block_until_ready(out)

    # Reference with the same bf16-operand / f32-accumulate matmul semantics.
    x2d = x.reshape(x.shape[0], -1)
    h_ref = jnp.maximum(
        jnp.dot(x2d.astype(jnp.bfloat16), w1.astype(jnp.bfloat16),
                preferred_element_type=jnp.float32) + b1, 0.0)
    logits_ref = jnp.dot(h_ref.astype(jnp.bfloat16), w2.astype(jnp.bfloat16),
                         preferred_element_type=jnp.float32) + b2
    ref = jax.nn.softmax(logits_ref, axis=1)

    assert out.shape == (8, 10)
    assert jnp.allclose(out, ref, atol=5e-3, rtol=5e-3), \
        f"max abs err = {jnp.max(jnp.abs(out - ref))}"
    assert jnp.allclose(jnp.sum(out, axis=1), 1.0, atol=5e-3)

    print("KERNEL_OK")
</pallas_src>

<mosaic_0001>
module attributes {stable_mosaic.version = 11 : i64} {
  func.func @_mlp_softmax_kernel(%arg0: i32, %arg1: memref<8x784xf32, #tpu.memory_space<vmem>>, %arg2: memref<784x512xbf16, #tpu.memory_space<vmem>>, %arg3: memref<1x512xf32, #tpu.memory_space<vmem>>, %arg4: memref<512x10xbf16, #tpu.memory_space<vmem>>, %arg5: memref<1x10xf32, #tpu.memory_space<vmem>>, %arg6: memref<8x10xf32, #tpu.memory_space<vmem>>) attributes {dimension_semantics = [#tpu.dimension_semantics<parallel>], iteration_bounds = array<i64: 1>, scalar_prefetch = 0 : i64, scratch_operands = 0 : i64, tpu.core_type = #tpu.core_type<tc>, window_params = [{transform_indices = @transform_0, window_bounds = array<i64: 8, 784>}, {pipeline_mode = #tpu.pipeline_mode<synchronous>, transform_indices = @transform_1, window_bounds = array<i64: 784, 512>}, {pipeline_mode = #tpu.pipeline_mode<synchronous>, transform_indices = @transform_2, window_bounds = array<i64: 1, 512>}, {pipeline_mode = #tpu.pipeline_mode<synchronous>, transform_indices = @transform_3, window_bounds = array<i64: 512, 10>}, {pipeline_mode = #tpu.pipeline_mode<synchronous>, transform_indices = @transform_4, window_bounds = array<i64: 1, 10>}, {transform_indices = @transform_5, window_bounds = array<i64: 8, 10>}]} {
    %c0 = arith.constant 0 : index
    %c0_0 = arith.constant 0 : index
    %0 = vector.load %arg1[%c0, %c0_0] : memref<8x784xf32, #tpu.memory_space<vmem>>, vector<8x784xf32>
    %1 = arith.truncf %0 : vector<8x784xf32> to vector<8x784xbf16>
    %c0_1 = arith.constant 0 : index
    %c0_2 = arith.constant 0 : index
    %2 = vector.load %arg2[%c0_1, %c0_2] : memref<784x512xbf16, #tpu.memory_space<vmem>>, vector<784x512xbf16>
    %cst = arith.constant dense<0.000000e+00> : vector<8x512xf32>
    %3 = tpu.matmul %1, %2, %cst {dimension_numbers = #tpu.dot_dimension_numbers<[1], [0], [0], [1], [0, 0, 1, 1], [], []>} : vector<8x784xbf16>, vector<784x512xbf16>, vector<8x512xf32> -> vector<8x512xf32>
    %c0_3 = arith.constant 0 : index
    %c0_4 = arith.constant 0 : index
    %4 = vector.load %arg3[%c0_3, %c0_4] : memref<1x512xf32, #tpu.memory_space<vmem>>, vector<1x512xf32>
    %5 = vector.broadcast %4 : vector<1x512xf32> to vector<8x512xf32>
    %6 = arith.addf %3, %5 : vector<8x512xf32>
    %cst_5 = arith.constant 0.000000e+00 : f32
    %7 = vector.broadcast %cst_5 : f32 to vector<8x512xf32>
    %8 = arith.maximumf %6, %7 : vector<8x512xf32>
    %9 = arith.truncf %8 : vector<8x512xf32> to vector<8x512xbf16>
    %c0_6 = arith.constant 0 : index
    %c0_7 = arith.constant 0 : index
    %10 = vector.load %arg4[%c0_6, %c0_7] : memref<512x10xbf16, #tpu.memory_space<vmem>>, vector<512x10xbf16>
    %cst_8 = arith.constant dense<0.000000e+00> : vector<8x10xf32>
    %11 = tpu.matmul %9, %10, %cst_8 {dimension_numbers = #tpu.dot_dimension_numbers<[1], [0], [0], [1], [0, 0, 1, 1], [], []>} : vector<8x512xbf16>, vector<512x10xbf16>, vector<8x10xf32> -> vector<8x10xf32>
    %c0_9 = arith.constant 0 : index
    %c0_10 = arith.constant 0 : index
    %12 = vector.load %arg5[%c0_9, %c0_10] : memref<1x10xf32, #tpu.memory_space<vmem>>, vector<1x10xf32>
    %13 = vector.broadcast %12 : vector<1x10xf32> to vector<8x10xf32>
    %14 = arith.addf %11, %13 : vector<8x10xf32>
    %cst_11 = arith.constant dense<0xFF800000> : vector<8xf32>
    %15 = vector.multi_reduction <maximumf>, %14, %cst_11 [1] : vector<8x10xf32> to vector<8xf32>
    %16 = vector.shape_cast %15 : vector<8xf32> to vector<8x1xf32>
    %17 = vector.broadcast %16 : vector<8x1xf32> to vector<8x10xf32>
    %18 = arith.subf %14, %17 : vector<8x10xf32>
    %19 = math.exp %18 : vector<8x10xf32>
    %cst_12 = arith.constant dense<0.000000e+00> : vector<8xf32>
    %20 = vector.multi_reduction <add>, %19, %cst_12 [1] : vector<8x10xf32> to vector<8xf32>
    %21 = vector.shape_cast %20 : vector<8xf32> to vector<8x1xf32>
    %22 = tpu.reciprocal %21 {approx = true} : vector<8x1xf32> -> vector<8x1xf32>
    %23 = vector.broadcast %22 : vector<8x1xf32> to vector<8x10xf32>
    %24 = arith.mulf %19, %23 : vector<8x10xf32>
    %c0_13 = arith.constant 0 : index
    %c0_14 = arith.constant 0 : index
    %25 = vector.load %arg6[%c0_13, %c0_14] : memref<8x10xf32, #tpu.memory_space<vmem>>, vector<8x10xf32>
    tpu.vector_store %arg6[%c0_13, %c0_14], %24 {strides = array<i32>} : memref<8x10xf32, #tpu.memory_space<vmem>>, vector<8x10xf32>,
    return
  }
  func.func @transform_0(%arg0: i32) -> (i32, i32) {
    %c0_i32 = arith.constant 0 : i32
    %c0_i32_0 = arith.constant 0 : i32
    return %arg0, %c0_i32 : i32, i32
  }
  func.func @transform_1(%arg0: i32) -> (i32, i32) {
    %c0_i32 = arith.constant 0 : i32
    %c0_i32_0 = arith.constant 0 : i32
    %c0_i32_1 = arith.constant 0 : i32
    return %c0_i32, %c0_i32_0 : i32, i32
  }
  func.func @transform_2(%arg0: i32) -> (i32, i32) {
    %c0_i32 = arith.constant 0 : i32
    %c0_i32_0 = arith.constant 0 : i32
    %c0_i32_1 = arith.constant 0 : i32
    return %c0_i32, %c0_i32_0 : i32, i32
  }
  func.func @transform_3(%arg0: i32) -> (i32, i32) {
    %c0_i32 = arith.constant 0 : i32
    %c0_i32_0 = arith.constant 0 : i32
    %c0_i32_1 = arith.constant 0 : i32
    return %c0_i32, %c0_i32_0 : i32, i32
  }
  func.func @transform_4(%arg0: i32) -> (i32, i32) {
    %c0_i32 = arith.constant 0 : i32
    %c0_i32_0 = arith.constant 0 : i32
    %c0_i32_1 = arith.constant 0 : i32
    return %c0_i32, %c0_i32_0 : i32, i32
  }
  func.func @transform_5(%arg0: i32) -> (i32, i32) {
    %c0_i32 = arith.constant 0 : i32
    %c0_i32_0 = arith.constant 0 : i32
    return %arg0, %c0_i32 : i32, i32
  }
}

</mosaic_0001>

<llo_original>
// kernel: network_forward.1
$region0: #{network_forward.1}
  #allocation0 [shape = 'u32[]', space=smem, size = 0x4, offset = 0x4, fixed_abs, tag = 'smem constant byte address 0x4 - core index']
  #allocation1 [shape = 'u32[144,128]{1,0:T(1,128)}', space=vmem, size = 0x12000, scoped, tag = 'internal scratch']
  %s0 = inlined_call_operand.vmem [shape: f32[8,784], index: 0, kind: input, shape index: {}]
  %s1 = inlined_call_operand.vmem [shape: bf16[784,512], index: 1, kind: input, shape index: {}]
  %s2 = inlined_call_operand.vmem [shape: f32[1,512], index: 2, kind: input, shape index: {}]
  %s3 = inlined_call_operand.vmem [shape: bf16[512,10], index: 3, kind: input, shape index: {}]
  %s4 = inlined_call_operand.vmem [shape: f32[1,10], index: 4, kind: input, shape index: {}]
  %s5 = inlined_call_operand.hbm [shape: f32[8,10], index: 5, kind: output, shape index: {}]
  %s6 = sld [smem:[#allocation0]]
  $region30: #{network_forward.1} parent=0
    _
  %s8 = ssub.s32 1, %s6
  %s9 = scalar_select 0, %s8, %s6
  $region1: #{network_forward.1} parent=0
    #allocation2 [shape = 'u8[4096]{0}', space=vmem, size = 0x1000, scoped, tag = 'output window, operand 0, single buffered']
    #allocation3 [shape = 's32[1]{0}', space=sflag, size = 0x4, scoped, tag = 'scoped memory for network_forward.1']
    %10 = vsyncpa [#allocation3], 0
    // Predicated region
    $region2: #{network_forward.1} parent=1 // pred_check
      _
    $region3: #{network_forward.1} parent=1 // pred_check_branch
      %12 = sbr.rel (0) target = $region5
    $region4: #{network_forward.1} parent=1 // pred_region
      _
    $region5: #{network_forward.1} parent=1 // pred_fallthru
      _
    // Predicated region
    $region6: #{network_forward.1} parent=1 // pred_check
      _
    $region7: #{network_forward.1} parent=1 // pred_check_branch
      %14 = sbr.rel (0) target = $region9
    $region8: #{network_forward.1} parent=1 // pred_region
      _
    $region9: #{network_forward.1} parent=1 // pred_fallthru
      _
    // Predicated region
    $region10: #{network_forward.1} parent=1 // pred_check
      _
    $region11: #{network_forward.1} parent=1 // pred_check_branch
      %16 = sbr.rel (0) target = $region13
    $region12: #{network_forward.1} parent=1 // pred_region
      _
    $region13: #{network_forward.1} parent=1 // pred_fallthru
      _
    // Predicated region
    $region14: #{network_forward.1} parent=1 // pred_check
      _
    $region15: #{network_forward.1} parent=1 // pred_check_branch
      %18 = sbr.rel (0) target = $region17
    $region16: #{network_forward.1} parent=1 // pred_region
      _
    $region17: #{network_forward.1} parent=1 // pred_fallthru
      _
    // Predicated region
    $region18: #{network_forward.1} parent=1 // pred_check
      _
    $region19: #{network_forward.1} parent=1 // pred_check_branch
      %20 = sbr.rel (0) target = $region21
    $region20: #{network_forward.1} parent=1 // pred_region
      _
    $region21: #{network_forward.1} parent=1 // pred_fallthru
      _
    %v22 = vld [vmem:[%s0] sm:$0xff]
    %v23 = vld [vmem:[%s0 + $0x8] sm:$0xff]
    %v24 = vld [vmem:[%s0 + $0x10] sm:$0xff]
    %v25 = vld [vmem:[%s0 + $0x18] sm:$0xff]
    %v26 = vld [vmem:[%s0 + $0x20] sm:$0xff]
    %v27 = vld [vmem:[%s0 + $0x28] sm:$0xff]
    %v28 = vld [vmem:[%s0 + $0x30] sm:$0xff]
    %v29 = vpack.c.bf16 %v22, %v22
    %v30 = vpack.c.bf16 %v23, %v23
    %v31 = vpack.c.bf16 %v24, %v24
    %v32 = vpack.c.bf16 %v25, %v25
    %v33 = vpack.c.bf16 %v26, %v26
    %v34 = vpack.c.bf16 %v27, %v27
    %v35 = vpack.c.bf16 %v28, %v28
    %v36 = vld [vmem:[%s1] sm:$0xff]
    %v37 = vld [vmem:[%s1 + $0x8] sm:$0xff]
    %v38 = vld [vmem:[%s1 + $0x10] sm:$0xff]
    %v39 = vld [vmem:[%s1 + $0x18] sm:$0xff]
    %v40 = vld [vmem:[%s1 + $0x20] sm:$0xff]
    %v41 = vld [vmem:[%s1 + $0x28] sm:$0xff]
    %v42 = vld [vmem:[%s1 + $0x30] sm:$0xff]
    %v43 = vld [vmem:[%s1 + $0x38] sm:$0xff]
    %v44 = vld [vmem:[%s1 + $0x40] sm:$0xff]
    %v45 = vld [vmem:[%s1 + $0x48] sm:$0xff]
    %v46 = vld [vmem:[%s1 + $0x50] sm:$0xff]
    %v47 = vld [vmem:[%s1 + $0x58] sm:$0xff]
    %v48 = vld [vmem:[%s1 + $0x60] sm:$0xff]
    %v49 = vld [vmem:[%s1 + $0x68] sm:$0xff]
    %v50 = vld [vmem:[%s1 + $0x70] sm:$0xff]
    %v51 = vld [vmem:[%s1 + $0x78] sm:$0xff]
    %v52 = vld [vmem:[%s1 + $0x80] sm:$0xff]
    %v53 = vld [vmem:[%s1 + $0x88] sm:$0xff]
    %v54 = vld [vmem:[%s1 + $0x90] sm:$0xff]
    %v55 = vld [vmem:[%s1 + $0x98] sm:$0xff]
    %v56 = vld [vmem:[%s1 + $0xa0] sm:$0xff]
    %v57 = vld [vmem:[%s1 + $0xa8] sm:$0xff]
    %v58 = vld [vmem:[%s1 + $0xb0] sm:$0xff]
    %v59 = vld [vmem:[%s1 + $0xb8] sm:$0xff]
    %v60 = vld [vmem:[%s1 + $0xc0] sm:$0xff]
    %v61 = vld [vmem:[%s1 + $0xc8] sm:$0xff]
    %v62 = vld [vmem:[%s1 + $0xd0] sm:$0xff]
    %v63 = vld [vmem:[%s1 + $0xd8] sm:$0xff]
    %v64 = vld [vmem:[%s1 + $0xe0] sm:$0xff]
    %v65 = vld [vmem:[%s1 + $0xe8] sm:$0xff]
    %v66 = vld [vmem:[%s1 + $0xf0] sm:$0xff]
    %v67 = vld [vmem:[%s1 + $0xf8] sm:$0xff]
    %v68 = vld [vmem:[%s1 + $0x100] sm:$0xff]
    %v69 = vld [vmem:[%s1 + $0x108] sm:$0xff]
    %v70 = vld [vmem:[%s1 + $0x110] sm:$0xff]
    %v71 = vld [vmem:[%s1 + $0x118] sm:$0xff]
    %v72 = vld [vmem:[%s1 + $0x120] sm:$0xff]
    %v73 = vld [vmem:[%s1 + $0x128] sm:$0xff]
    %v74 = vld [vmem:[%s1 + $0x130] sm:$0xff]
    %v75 = vld [vmem:[%s1 + $0x138] sm:$0xff]
    %v76 = vld [vmem:[%s1 + $0x140] sm:$0xff]
    %v77 = vld [vmem:[%s1 + $0x148] sm:$0xff]
    %v78 = vld [vmem:[%s1 + $0x150] sm:$0xff]
    %v79 = vld [vmem:[%s1 + $0x158] sm:$0xff]
    %v80 = vld [vmem:[%s1 + $0x160] sm:$0xff]
    %v81 = vld [vmem:[%s1 + $0x168] sm:$0xff]
    %v82 = vld [vmem:[%s1 + $0x170] sm:$0xff]
    %v83 = vld [vmem:[%s1 + $0x178] sm:$0xff]
    %v84 = vld [vmem:[%s1 + $0x180] sm:$0xff]
    %v85 = vld [vmem:[%s1 + $0x188] sm:$0xff]
    %v86 = vld [vmem:[%s1 + $0x190] sm:$0xff]
    %v87 = vld [vmem:[%s1 + $0x198] sm:$0xff]
    %v88 = vld [vmem:[%s1 + $0x1a0] sm:$0xff]
    %v89 = vld [vmem:[%s1 + $0x1a8] sm:$0xff]
    %v90 = vld [vmem:[%s1 + $0x1b0] sm:$0xff]
    %v91 = vld [vmem:[%s1 + $0x1b8] sm:$0xff]
    %v92 = vld [vmem:[%s1 + $0x1c0] sm:$0xff]
    %v93 = vld [vmem:[%s1 + $0x1c8] sm:$0xff]
    %v94 = vld [vmem:[%s1 + $0x1d0] sm:$0xff]
    %v95 = vld [vmem:[%s1 + $0x1d8] sm:$0xff]
    %v96 = vld [vmem:[%s1 + $0x1e0] sm:$0xff]
    %v97 = vld [vmem:[%s1 + $0x1e8] sm:$0xff]
    %v98 = vld [vmem:[%s1 + $0x1f0] sm:$0xff]
    %v99 = vld [vmem:[%s1 + $0x1f8] sm:$0xff]
    %v100 = vld [vmem:[%s1 + $0x200] sm:$0xff]
    %v101 = vld [vmem:[%s1 + $0x208] sm:$0xff]
    %v102 = vld [vmem:[%s1 + $0x210] sm:$0xff]
    %v103 = vld [vmem:[%s1 + $0x218] sm:$0xff]
    %v104 = vld [vmem:[%s1 + $0x220] sm:$0xff]
    %v105 = vld [vmem:[%s1 + $0x228] sm:$0xff]
    %v106 = vld [vmem:[%s1 + $0x230] sm:$0xff]
    %v107 = vld [vmem:[%s1 + $0x238] sm:$0xff]
    %v108 = vld [vmem:[%s1 + $0x240] sm:$0xff]
    %v109 = vld [vmem:[%s1 + $0x248] sm:$0xff]
    %v110 = vld [vmem:[%s1 + $0x250] sm:$0xff]
    %v111 = vld [vmem:[%s1 + $0x258] sm:$0xff]
    %v112 = vld [vmem:[%s1 + $0x260] sm:$0xff]
    %v113 = vld [vmem:[%s1 + $0x268] sm:$0xff]
    %v114 = vld [vmem:[%s1 + $0x270] sm:$0xff]
    %v115 = vld [vmem:[%s1 + $0x278] sm:$0xff]
    %v116 = vld [vmem:[%s1 + $0x280] sm:$0xff]
    %v117 = vld [vmem:[%s1 + $0x288] sm:$0xff]
    %v118 = vld [vmem:[%s1 + $0x290] sm:$0xff]
    %v119 = vld [vmem:[%s1 + $0x298] sm:$0xff]
    %v120 = vld [vmem:[%s1 + $0x2a0] sm:$0xff]
    %v121 = vld [vmem:[%s1 + $0x2a8] sm:$0xff]
    %v122 = vld [vmem:[%s1 + $0x2b0] sm:$0xff]
    %v123 = vld [vmem:[%s1 + $0x2b8] sm:$0xff]
    %v124 = vld [vmem:[%s1 + $0x2c0] sm:$0xff]
    %v125 = vld [vmem:[%s1 + $0x2c8] sm:$0xff]
    %v126 = vld [vmem:[%s1 + $0x2d0] sm:$0xff]
    %v127 = vld [vmem:[%s1 + $0x2d8] sm:$0xff]
    %v128 = vld [vmem:[%s1 + $0x2e0] sm:$0xff]
    %v129 = vld [vmem:[%s1 + $0x2e8] sm:$0xff]
    %v130 = vld [vmem:[%s1 + $0x2f0] sm:$0xff]
    %v131 = vld [vmem:[%s1 + $0x2f8] sm:$0xff]
    %v132 = vld [vmem:[%s1 + $0x300] sm:$0xff]
    %v133 = vld [vmem:[%s1 + $0x308] sm:$0xff]
    %v134 = vld [vmem:[%s1 + $0x310] sm:$0xff]
    %v135 = vld [vmem:[%s1 + $0x318] sm:$0xff]
    %v136 = vld [vmem:[%s1 + $0x320] sm:$0xff]
    %v137 = vld [vmem:[%s1 + $0x328] sm:$0xff]
    %v138 = vld [vmem:[%s1 + $0x330] sm:$0xff]
    %v139 = vld [vmem:[%s1 + $0x338] sm:$0xff]
    %v140 = vld [vmem:[%s1 + $0x340] sm:$0xff]
    %v141 = vld [vmem:[%s1 + $0x348] sm:$0xff]
    %v142 = vld [vmem:[%s1 + $0x350] sm:$0xff]
    %v143 = vld [vmem:[%s1 + $0x358] sm:$0xff]
    %v144 = vld [vmem:[%s1 + $0x360] sm:$0xff]
    %v145 = vld [vmem:[%s1 + $0x368] sm:$0xff]
    %v146 = vld [vmem:[%s1 + $0x370] sm:$0xff]
    %v147 = vld [vmem:[%s1 + $0x378] sm:$0xff]
    %v148 = vld [vmem:[%s1 + $0x380] sm:$0xff]
    %v149 = vld [vmem:[%s1 + $0x388] sm:$0xff]
    %v150 = vld [vmem:[%s1 + $0x390] sm:$0xff]
    %v151 = vld [vmem:[%s1 + $0x398] sm:$0xff]
    %v152 = vld [vmem:[%s1 + $0x3a0] sm:$0xff]
    %v153 = vld [vmem:[%s1 + $0x3a8] sm:$0xff]
    %v154 = vld [vmem:[%s1 + $0x3b0] sm:$0xff]
    %v155 = vld [vmem:[%s1 + $0x3b8] sm:$0xff]
    %v156 = vld [vmem:[%s1 + $0x3c0] sm:$0xff]
    %v157 = vld [vmem:[%s1 + $0x3c8] sm:$0xff]
    %v158 = vld [vmem:[%s1 + $0x3d0] sm:$0xff]
    %v159 = vld [vmem:[%s1 + $0x3d8] sm:$0xff]
    %v160 = vld [vmem:[%s1 + $0x3e0] sm:$0xff]
    %v161 = vld [vmem:[%s1 + $0x3e8] sm:$0xff]
    %v162 = vld [vmem:[%s1 + $0x3f0] sm:$0xff]
    %v163 = vld [vmem:[%s1 + $0x3f8] sm:$0xff]
    %v164 = vld [vmem:[%s1 + $0x400] sm:$0xff]
    %v165 = vld [vmem:[%s1 + $0x408] sm:$0xff]
    %v166 = vld [vmem:[%s1 + $0x410] sm:$0xff]
    %v167 = vld [vmem:[%s1 + $0x418] sm:$0xff]
    %v168 = vld [vmem:[%s1 + $0x420] sm:$0xff]
    %v169 = vld [vmem:[%s1 + $0x428] sm:$0xff]
    %v170 = vld [vmem:[%s1 + $0x430] sm:$0xff]
    %v171 = vld [vmem:[%s1 + $0x438] sm:$0xff]
    %v172 = vld [vmem:[%s1 + $0x440] sm:$0xff]
    %v173 = vld [vmem:[%s1 + $0x448] sm:$0xff]
    %v174 = vld [vmem:[%s1 + $0x450] sm:$0xff]
    %v175 = vld [vmem:[%s1 + $0x458] sm:$0xff]
    %v176 = vld [vmem:[%s1 + $0x460] sm:$0xff]
    %v177 = vld [vmem:[%s1 + $0x468] sm:$0xff]
    %v178 = vld [vmem:[%s1 + $0x470] sm:$0xff]
    %v179 = vld [vmem:[%s1 + $0x478] sm:$0xff]
    %v180 = vld [vmem:[%s1 + $0x480] sm:$0xff]
    %v181 = vld [vmem:[%s1 + $0x488] sm:$0xff]
    %v182 = vld [vmem:[%s1 + $0x490] sm:$0xff]
    %v183 = vld [vmem:[%s1 + $0x498] sm:$0xff]
    %v184 = vld [vmem:[%s1 + $0x4a0] sm:$0xff]
    %v185 = vld [vmem:[%s1 + $0x4a8] sm:$0xff]
    %v186 = vld [vmem:[%s1 + $0x4b0] sm:$0xff]
    %v187 = vld [vmem:[%s1 + $0x4b8] sm:$0xff]
    %v188 = vld [vmem:[%s1 + $0x4c0] sm:$0xff]
    %v189 = vld [vmem:[%s1 + $0x4c8] sm:$0xff]
    %v190 = vld [vmem:[%s1 + $0x4d0] sm:$0xff]
    %v191 = vld [vmem:[%s1 + $0x4d8] sm:$0xff]
    %v192 = vld [vmem:[%s1 + $0x4e0] sm:$0xff]
    %v193 = vld [vmem:[%s1 + $0x4e8] sm:$0xff]
    %v194 = vld [vmem:[%s1 + $0x4f0] sm:$0xff]
    %v195 = vld [vmem:[%s1 + $0x4f8] sm:$0xff]
    %v196 = vld [vmem:[%s1 + $0x500] sm:$0xff]
    %v197 = vld [vmem:[%s1 + $0x508] sm:$0xff]
    %v198 = vld [vmem:[%s1 + $0x510] sm:$0xff]
    %v199 = vld [vmem:[%s1 + $0x518] sm:$0xff]
    %v200 = vld [vmem:[%s1 + $0x520] sm:$0xff]
    %v201 = vld [vmem:[%s1 + $0x528] sm:$0xff]
    %v202 = vld [vmem:[%s1 + $0x530] sm:$0xff]
    %v203 = vld [vmem:[%s1 + $0x538] sm:$0xff]
    %v204 = vld [vmem:[%s1 + $0x540] sm:$0xff]
    %v205 = vld [vmem:[%s1 + $0x548] sm:$0xff]
    %v206 = vld [vmem:[%s1 + $0x550] sm:$0xff]
    %v207 = vld [vmem:[%s1 + $0x558] sm:$0xff]
    %v208 = vld [vmem:[%s1 + $0x560] sm:$0xff]
    %v209 = vld [vmem:[%s1 + $0x568] sm:$0xff]
    %v210 = vld [vmem:[%s1 + $0x570] sm:$0xff]
    %v211 = vld [vmem:[%s1 + $0x578] sm:$0xff]
    %v212 = vld [vmem:[%s1 + $0x580] sm:$0xff]
    %v213 = vld [vmem:[%s1 + $0x588] sm:$0xff]
    %v214 = vld [vmem:[%s1 + $0x590] sm:$0xff]
    %v215 = vld [vmem:[%s1 + $0x598] sm:$0xff]
    %v216 = vld [vmem:[%s1 + $0x5a0] sm:$0xff]
    %v217 = vld [vmem:[%s1 + $0x5a8] sm:$0xff]
    %v218 = vld [vmem:[%s1 + $0x5b0] sm:$0xff]
    %v219 = vld [vmem:[%s1 + $0x5b8] sm:$0xff]
    %v220 = vld [vmem:[%s1 + $0x5c0] sm:$0xff]
    %v221 = vld [vmem:[%s1 + $0x5c8] sm:$0xff]
    %v222 = vld [vmem:[%s1 + $0x5d0] sm:$0xff]
    %v223 = vld [vmem:[%s1 + $0x5d8] sm:$0xff]
    %v224 = vld [vmem:[%s1 + $0x5e0] sm:$0xff]
    %v225 = vld [vmem:[%s1 + $0x5e8] sm:$0xff]
    %v226 = vld [vmem:[%s1 + $0x5f0] sm:$0xff]
    %v227 = vld [vmem:[%s1 + $0x5f8] sm:$0xff]
    %v228 = vld [vmem:[%s1 + $0x600] sm:$0xff]
    %v229 = vld [vmem:[%s1 + $0x608] sm:$0xff]
    %v230 = vld [vmem:[%s1 + $0x610] sm:$0xff]
    %v231 = vld [vmem:[%s1 + $0x618] sm:$0xff]
    %v232 = vld [vmem:[%s2] sm:$0xf]
    %v234 = vlaneseq
    %v235 = vshrl.u32 %v234, 7
    %v236 = vsub.s32 0, %v235
    %v237 = vrot.slane %v232, %v236
    %v238 = vlaneseq
    %v239 = vshrl.u32 %v238, 7
    %v240 = vsub.s32 1, %v239
    %v241 = vrot.slane %v232, %v240
    %v242 = vlaneseq
    %v243 = vshrl.u32 %v242, 7
    %v244 = vsub.s32 2, %v243
    %v245 = vrot.slane %v232, %v244
    %v246 = vlaneseq
    %v247 = vshrl.u32 %v246, 7
    %v248 = vsub.s32 3, %v247
    %v249 = vrot.slane %v232, %v248
    %v450 = vunpack.c.l.b16 %v36
    %v451 = vunpack.c.h.b16 %v36
    %v452 = vunpack.c.l.b16 %v37
    %v453 = vunpack.c.h.b16 %v37
    %v454 = vunpack.c.l.b16 %v38
    %v455 = vunpack.c.h.b16 %v38
    %v456 = vunpack.c.l.b16 %v39
    %v457 = vunpack.c.h.b16 %v39
    %v458 = vunpack.c.l.b16 %v40
    %v459 = vunpack.c.h.b16 %v40
    %v460 = vunpack.c.l.b16 %v41
    %v461 = vunpack.c.h.b16 %v41
    %v462 = vunpack.c.l.b16 %v42
    %v463 = vunpack.c.h.b16 %v42
    %v464 = vunpack.c.l.b16 %v43
    %v465 = vunpack.c.h.b16 %v43
    %v466 = vunpack.c.l.b16 %v44
    %v467 = vunpack.c.h.b16 %v44
    %v468 = vunpack.c.l.b16 %v45
    %v469 = vunpack.c.h.b16 %v45
    %v470 = vunpack.c.l.b16 %v46
    %v471 = vunpack.c.h.b16 %v46
    %v472 = vunpack.c.l.b16 %v47
    %v473 = vunpack.c.h.b16 %v47
    %v474 = vunpack.c.l.b16 %v48
    %v475 = vunpack.c.h.b16 %v48
    %v476 = vunpack.c.l.b16 %v49
    %v477 = vunpack.c.h.b16 %v49
    %v478 = vunpack.c.l.b16 %v50
    %v479 = vunpack.c.h.b16 %v50
    %v480 = vunpack.c.l.b16 %v51
    %v481 = vunpack.c.h.b16 %v51
    %v482 = vunpack.c.l.b16 %v52
    %v483 = vunpack.c.h.b16 %v52
    %v484 = vunpack.c.l.b16 %v53
    %v485 = vunpack.c.h.b16 %v53
    %v486 = vunpack.c.l.b16 %v54
    %v487 = vunpack.c.h.b16 %v54
    %v488 = vunpack.c.l.b16 %v55
    %v489 = vunpack.c.h.b16 %v55
    %v490 = vunpack.c.l.b16 %v56
    %v491 = vunpack.c.h.b16 %v56
    %v492 = vunpack.c.l.b16 %v57
    %v493 = vunpack.c.h.b16 %v57
    %v494 = vunpack.c.l.b16 %v58
    %v495 = vunpack.c.h.b16 %v58
    %v496 = vunpack.c.l.b16 %v59
    %v497 = vunpack.c.h.b16 %v59
    %v498 = vunpack.c.l.b16 %v60
    %v499 = vunpack.c.h.b16 %v60
    %v500 = vunpack.c.l.b16 %v61
    %v501 = vunpack.c.h.b16 %v61
    %v502 = vunpack.c.l.b16 %v62
    %v503 = vunpack.c.h.b16 %v62
    %v504 = vunpack.c.l.b16 %v63
    %v505 = vunpack.c.h.b16 %v63
    %v506 = vunpack.c.l.b16 %v64
    %v507 = vunpack.c.h.b16 %v64
    %v508 = vunpack.c.l.b16 %v65
    %v509 = vunpack.c.h.b16 %v65
    %v510 = vunpack.c.l.b16 %v66
    %v511 = vunpack.c.h.b16 %v66
    %v512 = vunpack.c.l.b16 %v67
    %v513 = vunpack.c.h.b16 %v67
    %v514 = vunpack.c.l.b16 %v68
    %v515 = vunpack.c.h.b16 %v68
    %v516 = vunpack.c.l.b16 %v69
    %v517 = vunpack.c.h.b16 %v69
    %v518 = vunpack.c.l.b16 %v70
    %v519 = vunpack.c.h.b16 %v70
    %v520 = vunpack.c.l.b16 %v71
    %v521 = vunpack.c.h.b16 %v71
    %v522 = vunpack.c.l.b16 %v72
    %v523 = vunpack.c.h.b16 %v72
    %v524 = vunpack.c.l.b16 %v73
    %v525 = vunpack.c.h.b16 %v73
    %v526 = vunpack.c.l.b16 %v74
    %v527 = vunpack.c.h.b16 %v74
    %v528 = vunpack.c.l.b16 %v75
    %v529 = vunpack.c.h.b16 %v75
    %v530 = vunpack.c.l.b16 %v76
    %v531 = vunpack.c.h.b16 %v76
    %v532 = vunpack.c.l.b16 %v77
    %v533 = vunpack.c.h.b16 %v77
    %v534 = vunpack.c.l.b16 %v78
    %v535 = vunpack.c.h.b16 %v78
    %v536 = vunpack.c.l.b16 %v79
    %v537 = vunpack.c.h.b16 %v79
    %v538 = vunpack.c.l.b16 %v80
    %v539 = vunpack.c.h.b16 %v80
    %v540 = vunpack.c.l.b16 %v81
    %v541 = vunpack.c.h.b16 %v81
    %v542 = vunpack.c.l.b16 %v82
    %v543 = vunpack.c.h.b16 %v82
    %v544 = vunpack.c.l.b16 %v83
    %v545 = vunpack.c.h.b16 %v83
    %v546 = vunpack.c.l.b16 %v84
    %v547 = vunpack.c.h.b16 %v84
    %v548 = vunpack.c.l.b16 %v85
    %v549 = vunpack.c.h.b16 %v85
    %v550 = vunpack.c.l.b16 %v86
    %v551 = vunpack.c.h.b16 %v86
    %v552 = vunpack.c.l.b16 %v87
    %v553 = vunpack.c.h.b16 %v87
    %v554 = vunpack.c.l.b16 %v88
    %v555 = vunpack.c.h.b16 %v88
    %v556 = vunpack.c.l.b16 %v89
    %v557 = vunpack.c.h.b16 %v89
    %v558 = vunpack.c.l.b16 %v90
    %v559 = vunpack.c.h.b16 %v90
    %v560 = vunpack.c.l.b16 %v91
    %v561 = vunpack.c.h.b16 %v91
    %v562 = vunpack.c.l.b16 %v92
    %v563 = vunpack.c.h.b16 %v92
    %v564 = vunpack.c.l.b16 %v93
    %v565 = vunpack.c.h.b16 %v93
    %v566 = vunpack.c.l.b16 %v94
    %v567 = vunpack.c.h.b16 %v94
    %v568 = vunpack.c.l.b16 %v95
    %v569 = vunpack.c.h.b16 %v95
    %v570 = vunpack.c.l.b16 %v96
    %v571 = vunpack.c.h.b16 %v96
    %v572 = vunpack.c.l.b16 %v97
    %v573 = vunpack.c.h.b16 %v97
    %v574 = vunpack.c.l.b16 %v98
    %v575 = vunpack.c.h.b16 %v98
    %v576 = vunpack.c.l.b16 %v99
    %v577 = vunpack.c.h.b16 %v99
    %v578 = vunpack.c.l.b16 %v100
    %v579 = vunpack.c.h.b16 %v100
    %v580 = vunpack.c.l.b16 %v101
    %v581 = vunpack.c.h.b16 %v101
    %v582 = vunpack.c.l.b16 %v102
    %v583 = vunpack.c.h.b16 %v102
    %v584 = vunpack.c.l.b16 %v103
    %v585 = vunpack.c.h.b16 %v103
    %v586 = vunpack.c.l.b16 %v104
    %v587 = vunpack.c.h.b16 %v104
    %v588 = vunpack.c.l.b16 %v105
    %v589 = vunpack.c.h.b16 %v105
    %v590 = vunpack.c.l.b16 %v106
    %v591 = vunpack.c.h.b16 %v106
    %v592 = vunpack.c.l.b16 %v107
    %v593 = vunpack.c.h.b16 %v107
    %v594 = vunpack.c.l.b16 %v108
    %v595 = vunpack.c.h.b16 %v108
    %v596 = vunpack.c.l.b16 %v109
    %v597 = vunpack.c.h.b16 %v109
    %v598 = vunpack.c.l.b16 %v110
    %v599 = vunpack.c.h.b16 %v110
    %v600 = vunpack.c.l.b16 %v111
    %v601 = vunpack.c.h.b16 %v111
    %v602 = vunpack.c.l.b16 %v112
    %v603 = vunpack.c.h.b16 %v112
    %v604 = vunpack.c.l.b16 %v113
    %v605 = vunpack.c.h.b16 %v113
    %v606 = vunpack.c.l.b16 %v114
    %v607 = vunpack.c.h.b16 %v114
    %v608 = vunpack.c.l.b16 %v115
    %v609 = vunpack.c.h.b16 %v115
    %v610 = vunpack.c.l.b16 %v116
    %v611 = vunpack.c.h.b16 %v116
    %v612 = vunpack.c.l.b16 %v117
    %v613 = vunpack.c.h.b16 %v117
    %v614 = vunpack.c.l.b16 %v118
    %v615 = vunpack.c.h.b16 %v118
    %v616 = vunpack.c.l.b16 %v119
    %v617 = vunpack.c.h.b16 %v119
    %v618 = vunpack.c.l.b16 %v120
    %v619 = vunpack.c.h.b16 %v120
    %v620 = vunpack.c.l.b16 %v121
    %v621 = vunpack.c.h.b16 %v121
    %v622 = vunpack.c.l.b16 %v122
    %v623 = vunpack.c.h.b16 %v122
    %v624 = vunpack.c.l.b16 %v123
    %v625 = vunpack.c.h.b16 %v123
    %v626 = vunpack.c.l.b16 %v124
    %v627 = vunpack.c.h.b16 %v124
    %v628 = vunpack.c.l.b16 %v125
    %v629 = vunpack.c.h.b16 %v125
    %v630 = vunpack.c.l.b16 %v126
    %v631 = vunpack.c.h.b16 %v126
    %v632 = vunpack.c.l.b16 %v127
    %v633 = vunpack.c.h.b16 %v127
    %v634 = vunpack.c.l.b16 %v128
    %v635 = vunpack.c.h.b16 %v128
    %v636 = vunpack.c.l.b16 %v129
    %v637 = vunpack.c.h.b16 %v129
    %v638 = vunpack.c.l.b16 %v130
    %v639 = vunpack.c.h.b16 %v130
    %v640 = vunpack.c.l.b16 %v131
    %v641 = vunpack.c.h.b16 %v131
    %v642 = vunpack.c.l.b16 %v132
    %v643 = vunpack.c.h.b16 %v132
    %v644 = vunpack.c.l.b16 %v133
    %v645 = vunpack.c.h.b16 %v133
    %v646 = vunpack.c.l.b16 %v134
    %v647 = vunpack.c.h.b16 %v134
    %v648 = vunpack.c.l.b16 %v135
    %v649 = vunpack.c.h.b16 %v135
    %v650 = vunpack.c.l.b16 %v136
    %v651 = vunpack.c.h.b16 %v136
    %v652 = vunpack.c.l.b16 %v137
    %v653 = vunpack.c.h.b16 %v137
    %v654 = vunpack.c.l.b16 %v138
    %v655 = vunpack.c.h.b16 %v138
    %v656 = vunpack.c.l.b16 %v139
    %v657 = vunpack.c.h.b16 %v139
    %v658 = vunpack.c.l.b16 %v140
    %v659 = vunpack.c.h.b16 %v140
    %v660 = vunpack.c.l.b16 %v141
    %v661 = vunpack.c.h.b16 %v141
    %v662 = vunpack.c.l.b16 %v142
    %v663 = vunpack.c.h.b16 %v142
    %v664 = vunpack.c.l.b16 %v143
    %v665 = vunpack.c.h.b16 %v143
    %v666 = vunpack.c.l.b16 %v144
    %v667 = vunpack.c.h.b16 %v144
    %v668 = vunpack.c.l.b16 %v145
    %v669 = vunpack.c.h.b16 %v145
    %v670 = vunpack.c.l.b16 %v146
    %v671 = vunpack.c.h.b16 %v146
    %v672 = vunpack.c.l.b16 %v147
    %v673 = vunpack.c.h.b16 %v147
    %v674 = vunpack.c.l.b16 %v148
    %v675 = vunpack.c.h.b16 %v148
    %v676 = vunpack.c.l.b16 %v149
    %v677 = vunpack.c.h.b16 %v149
    %v678 = vunpack.c.l.b16 %v150
    %v679 = vunpack.c.h.b16 %v150
    %v680 = vunpack.c.l.b16 %v151
    %v681 = vunpack.c.h.b16 %v151
    %v682 = vunpack.c.l.b16 %v152
    %v683 = vunpack.c.h.b16 %v152
    %v684 = vunpack.c.l.b16 %v153
    %v685 = vunpack.c.h.b16 %v153
    %v686 = vunpack.c.l.b16 %v154
    %v687 = vunpack.c.h.b16 %v154
    %v688 = vunpack.c.l.b16 %v155
    %v689 = vunpack.c.h.b16 %v155
    %v690 = vunpack.c.l.b16 %v156
    %v691 = vunpack.c.h.b16 %v156
    %v692 = vunpack.c.l.b16 %v157
    %v693 = vunpack.c.h.b16 %v157
    %v694 = vunpack.c.l.b16 %v158
    %v695 = vunpack.c.h.b16 %v158
    %v696 = vunpack.c.l.b16 %v159
    %v697 = vunpack.c.h.b16 %v159
    %v698 = vunpack.c.l.b16 %v160
    %v699 = vunpack.c.h.b16 %v160
    %v700 = vunpack.c.l.b16 %v161
    %v701 = vunpack.c.h.b16 %v161
    %v702 = vunpack.c.l.b16 %v162
    %v703 = vunpack.c.h.b16 %v162
    %v704 = vunpack.c.l.b16 %v163
    %v705 = vunpack.c.h.b16 %v163
    %v706 = vunpack.c.l.b16 %v164
    %v707 = vunpack.c.h.b16 %v164
    %v708 = vunpack.c.l.b16 %v165
    %v709 = vunpack.c.h.b16 %v165
    %v710 = vunpack.c.l.b16 %v166
    %v711 = vunpack.c.h.b16 %v166
    %v712 = vunpack.c.l.b16 %v167
    %v713 = vunpack.c.h.b16 %v167
    %v714 = vunpack.c.l.b16 %v168
    %v715 = vunpack.c.h.b16 %v168
    %v716 = vunpack.c.l.b16 %v169
    %v717 = vunpack.c.h.b16 %v169
    %v718 = vunpack.c.l.b16 %v170
    %v719 = vunpack.c.h.b16 %v170
    %v720 = vunpack.c.l.b16 %v171
    %v721 = vunpack.c.h.b16 %v171
    %v722 = vunpack.c.l.b16 %v172
    %v723 = vunpack.c.h.b16 %v172
    %v724 = vunpack.c.l.b16 %v173
    %v725 = vunpack.c.h.b16 %v173
    %v726 = vunpack.c.l.b16 %v174
    %v727 = vunpack.c.h.b16 %v174
    %v728 = vunpack.c.l.b16 %v175
    %v729 = vunpack.c.h.b16 %v175
    %v730 = vunpack.c.l.b16 %v176
    %v731 = vunpack.c.h.b16 %v176
    %v732 = vunpack.c.l.b16 %v177
    %v733 = vunpack.c.h.b16 %v177
    %v734 = vunpack.c.l.b16 %v178
    %v735 = vunpack.c.h.b16 %v178
    %v736 = vunpack.c.l.b16 %v179
    %v737 = vunpack.c.h.b16 %v179
    %v738 = vunpack.c.l.b16 %v180
    %v739 = vunpack.c.h.b16 %v180
    %v740 = vunpack.c.l.b16 %v181
    %v741 = vunpack.c.h.b16 %v181
    %v742 = vunpack.c.l.b16 %v182
    %v743 = vunpack.c.h.b16 %v182
    %v744 = vunpack.c.l.b16 %v183
    %v745 = vunpack.c.h.b16 %v183
    %v746 = vunpack.c.l.b16 %v184
    %v747 = vunpack.c.h.b16 %v184
    %v748 = vunpack.c.l.b16 %v185
    %v749 = vunpack.c.h.b16 %v185
    %v750 = vunpack.c.l.b16 %v186
    %v751 = vunpack.c.h.b16 %v186
    %v752 = vunpack.c.l.b16 %v187
    %v753 = vunpack.c.h.b16 %v187
    %v754 = vunpack.c.l.b16 %v188
    %v755 = vunpack.c.h.b16 %v188
    %v756 = vunpack.c.l.b16 %v189
    %v757 = vunpack.c.h.b16 %v189
    %v758 = vunpack.c.l.b16 %v190
    %v759 = vunpack.c.h.b16 %v190
    %v760 = vunpack.c.l.b16 %v191
    %v761 = vunpack.c.h.b16 %v191
    %v762 = vunpack.c.l.b16 %v192
    %v763 = vunpack.c.h.b16 %v192
    %v764 = vunpack.c.l.b16 %v193
    %v765 = vunpack.c.h.b16 %v193
    %v766 = vunpack.c.l.b16 %v194
    %v767 = vunpack.c.h.b16 %v194
    %v768 = vunpack.c.l.b16 %v195
    %v769 = vunpack.c.h.b16 %v195
    %v770 = vunpack.c.l.b16 %v196
    %v771 = vunpack.c.h.b16 %v196
    %v772 = vunpack.c.l.b16 %v197
    %v773 = vunpack.c.h.b16 %v197
    %v774 = vunpack.c.l.b16 %v198
    %v775 = vunpack.c.h.b16 %v198
    %v776 = vunpack.c.l.b16 %v199
    %v777 = vunpack.c.h.b16 %v199
    %v778 = vunpack.c.l.b16 %v200
    %v779 = vunpack.c.h.b16 %v200
    %v780 = vunpack.c.l.b16 %v201
    %v781 = vunpack.c.h.b16 %v201
    %v782 = vunpack.c.l.b16 %v202
    %v783 = vunpack.c.h.b16 %v202
    %v784 = vunpack.c.l.b16 %v203
    %v785 = vunpack.c.h.b16 %v203
    %v786 = vunpack.c.l.b16 %v204
    %v787 = vunpack.c.h.b16 %v204
    %v788 = vunpack.c.l.b16 %v205
    %v789 = vunpack.c.h.b16 %v205
    %v790 = vunpack.c.l.b16 %v206
    %v791 = vunpack.c.h.b16 %v206
    %v792 = vunpack.c.l.b16 %v207
    %v793 = vunpack.c.h.b16 %v207
    %v794 = vunpack.c.l.b16 %v208
    %v795 = vunpack.c.h.b16 %v208
    %v796 = vunpack.c.l.b16 %v209
    %v797 = vunpack.c.h.b16 %v209
    %v798 = vunpack.c.l.b16 %v210
    %v799 = vunpack.c.h.b16 %v210
    %v800 = vunpack.c.l.b16 %v211
    %v801 = vunpack.c.h.b16 %v211
    %v802 = vunpack.c.l.b16 %v212
    %v803 = vunpack.c.h.b16 %v212
    %v804 = vunpack.c.l.b16 %v213
    %v805 = vunpack.c.h.b16 %v213
    %v806 = vunpack.c.l.b16 %v214
    %v807 = vunpack.c.h.b16 %v214
    %v808 = vunpack.c.l.b16 %v215
    %v809 = vunpack.c.h.b16 %v215
    %v810 = vunpack.c.l.b16 %v216
    %v811 = vunpack.c.h.b16 %v216
    %v812 = vunpack.c.l.b16 %v217
    %v813 = vunpack.c.h.b16 %v217
    %v814 = vunpack.c.l.b16 %v218
    %v815 = vunpack.c.h.b16 %v218
    %v816 = vunpack.c.l.b16 %v219
    %v817 = vunpack.c.h.b16 %v219
    %v818 = vunpack.c.l.b16 %v220
    %v819 = vunpack.c.h.b16 %v220
    %v820 = vunpack.c.l.b16 %v221
    %v821 = vunpack.c.h.b16 %v221
    %v822 = vunpack.c.l.b16 %v222
    %v823 = vunpack.c.h.b16 %v222
    %v824 = vunpack.c.l.b16 %v223
    %v825 = vunpack.c.h.b16 %v223
    %v826 = vunpack.c.l.b16 %v224
    %v827 = vunpack.c.h.b16 %v224
    %v828 = vunpack.c.l.b16 %v225
    %v829 = vunpack.c.h.b16 %v225
    %v830 = vunpack.c.l.b16 %v226
    %v831 = vunpack.c.h.b16 %v226
    %v832 = vunpack.c.l.b16 %v227
    %v833 = vunpack.c.h.b16 %v227
    %v834 = vunpack.c.l.b16 %v228
    %v835 = vunpack.c.h.b16 %v228
    %v836 = vunpack.c.l.b16 %v229
    %v837 = vunpack.c.h.b16 %v229
    %v838 = vunpack.c.l.b16 %v230
    %v839 = vunpack.c.h.b16 %v230
    %v840 = vunpack.c.l.b16 %v231
    %v841 = vunpack.c.h.b16 %v231
    %v842 = vpack.c.b16 %v454, %v450
    %v843 = vpack.c.b16 %v455, %v451
    %v844 = vpack.c.b16 %v456, %v452
    %v845 = vpack.c.b16 %v457, %v453
    %v846 = vpack.c.b16 %v462, %v458
    %v847 = vpack.c.b16 %v463, %v459
    %v848 = vpack.c.b16 %v464, %v460
    %v849 = vpack.c.b16 %v465, %v461
    %v850 = vpack.c.b16 %v470, %v466
    %v851 = vpack.c.b16 %v471, %v467
    %v852 = vpack.c.b16 %v472, %v468
    %v853 = vpack.c.b16 %v473, %v469
    %v854 = vpack.c.b16 %v478, %v474
    %v855 = vpack.c.b16 %v479, %v475
    %v856 = vpack.c.b16 %v480, %v476
    %v857 = vpack.c.b16 %v481, %v477
    %v858 = vpack.c.b16 %v486, %v482
    %v859 = vpack.c.b16 %v487, %v483
    %v860 = vpack.c.b16 %v488, %v484
    %v861 = vpack.c.b16 %v489, %v485
    %v862 = vpack.c.b16 %v494, %v490
    %v863 = vpack.c.b16 %v495, %v491
    %v864 = vpack.c.b16 %v496, %v492
    %v865 = vpack.c.b16 %v497, %v493
    %v866 = vpack.c.b16 %v502, %v498
    %v867 = vpack.c.b16 %v503, %v499
    %v868 = vpack.c.b16 %v504, %v500
    %v869 = vpack.c.b16 %v505, %v501
    %v870 = vpack.c.b16 %v510, %v506
    %v871 = vpack.c.b16 %v511, %v507
    %v872 = vpack.c.b16 %v512, %v508
    %v873 = vpack.c.b16 %v513, %v509
    %v874 = vpack.c.b16 %v518, %v514
    %v875 = vpack.c.b16 %v519, %v515
    %v876 = vpack.c.b16 %v520, %v516
    %v877 = vpack.c.b16 %v521, %v517
    %v878 = vpack.c.b16 %v526, %v522
    %v879 = vpack.c.b16 %v527, %v523
    %v880 = vpack.c.b16 %v528, %v524
    %v881 = vpack.c.b16 %v529, %v525
    %v882 = vpack.c.b16 %v534, %v530
    %v883 = vpack.c.b16 %v535, %v531
    %v884 = vpack.c.b16 %v536, %v532
    %v885 = vpack.c.b16 %v537, %v533
    %v886 = vpack.c.b16 %v542, %v538
    %v887 = vpack.c.b16 %v543, %v539
    %v888 = vpack.c.b16 %v544, %v540
    %v889 = vpack.c.b16 %v545, %v541
    %v890 = vpack.c.b16 %v550, %v546
    %v891 = vpack.c.b16 %v551, %v547
    %v892 = vpack.c.b16 %v552, %v548
    %v893 = vpack.c.b16 %v553, %v549
    %v894 = vpack.c.b16 %v558, %v554
    %v895 = vpack.c.b16 %v559, %v555
    %v896 = vpack.c.b16 %v560, %v556
    %v897 = vpack.c.b16 %v561, %v557
    %v898 = vpack.c.b16 %v566, %v562
    %v899 = vpack.c.b16 %v567, %v563
    %v900 = vpack.c.b16 %v568, %v564
    %v901 = vpack.c.b16 %v569, %v565
    %v902 = vpack.c.b16 %v574, %v570
    %v903 = vpack.c.b16 %v575, %v571
    %v904 = vpack.c.b16 %v576, %v572
    %v905 = vpack.c.b16 %v577, %v573
    %v906 = vpack.c.b16 %v582, %v578
    %v907 = vpack.c.b16 %v583, %v579
    %v908 = vpack.c.b16 %v584, %v580
    %v909 = vpack.c.b16 %v585, %v581
    %v910 = vpack.c.b16 %v590, %v586
    %v911 = vpack.c.b16 %v591, %v587
    %v912 = vpack.c.b16 %v592, %v588
    %v913 = vpack.c.b16 %v593, %v589
    %v914 = vpack.c.b16 %v598, %v594
    %v915 = vpack.c.b16 %v599, %v595
    %v916 = vpack.c.b16 %v600, %v596
    %v917 = vpack.c.b16 %v601, %v597
    %v918 = vpack.c.b16 %v606, %v602
    %v919 = vpack.c.b16 %v607, %v603
    %v920 = vpack.c.b16 %v608, %v604
    %v921 = vpack.c.b16 %v609, %v605
    %v922 = vpack.c.b16 %v614, %v610
    %v923 = vpack.c.b16 %v615, %v611
    %v924 = vpack.c.b16 %v616, %v612
    %v925 = vpack.c.b16 %v617, %v613
    %v926 = vpack.c.b16 %v622, %v618
    %v927 = vpack.c.b16 %v623, %v619
    %v928 = vpack.c.b16 %v624, %v620
    %v929 = vpack.c.b16 %v625, %v621
    %v930 = vpack.c.b16 %v630, %v626
    %v931 = vpack.c.b16 %v631, %v627
    %v932 = vpack.c.b16 %v632, %v628
    %v933 = vpack.c.b16 %v633, %v629
    %v934 = vpack.c.b16 %v638, %v634
    %v935 = vpack.c.b16 %v639, %v635
    %v936 = vpack.c.b16 %v640, %v636
    %v937 = vpack.c.b16 %v641, %v637
    %v938 = vpack.c.b16 %v646, %v642
    %v939 = vpack.c.b16 %v647, %v643
    %v940 = vpack.c.b16 %v648, %v644
    %v941 = vpack.c.b16 %v649, %v645
    %v942 = vpack.c.b16 %v654, %v650
    %v943 = vpack.c.b16 %v655, %v651
    %v944 = vpack.c.b16 %v656, %v652
    %v945 = vpack.c.b16 %v657, %v653
    %v946 = vpack.c.b16 %v662, %v658
    %v947 = vpack.c.b16 %v663, %v659
    %v948 = vpack.c.b16 %v664, %v660
    %v949 = vpack.c.b16 %v665, %v661
    %v950 = vpack.c.b16 %v670, %v666
    %v951 = vpack.c.b16 %v671, %v667
    %v952 = vpack.c.b16 %v672, %v668
    %v953 = vpack.c.b16 %v673, %v669
    %v954 = vpack.c.b16 %v678, %v674
    %v955 = vpack.c.b16 %v679, %v675
    %v956 = vpack.c.b16 %v680, %v676
    %v957 = vpack.c.b16 %v681, %v677
    %v958 = vpack.c.b16 %v686, %v682
    %v959 = vpack.c.b16 %v687, %v683
    %v960 = vpack.c.b16 %v688, %v684
    %v961 = vpack.c.b16 %v689, %v685
    %v962 = vpack.c.b16 %v694, %v690
    %v963 = vpack.c.b16 %v695, %v691
    %v964 = vpack.c.b16 %v696, %v692
    %v965 = vpack.c.b16 %v697, %v693
    %v966 = vpack.c.b16 %v702, %v698
    %v967 = vpack.c.b16 %v703, %v699
    %v968 = vpack.c.b16 %v704, %v700
    %v969 = vpack.c.b16 %v705, %v701
    %v970 = vpack.c.b16 %v710, %v706
    %v971 = vpack.c.b16 %v711, %v707
    %v972 = vpack.c.b16 %v712, %v708
    %v973 = vpack.c.b16 %v713, %v709
    %v974 = vpack.c.b16 %v718, %v714
    %v975 = vpack.c.b16 %v719, %v715
    %v976 = vpack.c.b16 %v720, %v716
    %v977 = vpack.c.b16 %v721, %v717
    %v978 = vpack.c.b16 %v726, %v722
    %v979 = vpack.c.b16 %v727, %v723
    %v980 = vpack.c.b16 %v728, %v724
    %v981 = vpack.c.b16 %v729, %v725
    %v982 = vpack.c.b16 %v734, %v730
    %v983 = vpack.c.b16 %v735, %v731
    %v984 = vpack.c.b16 %v736, %v732
    %v985 = vpack.c.b16 %v737, %v733
    %v986 = vpack.c.b16 %v742, %v738
    %v987 = vpack.c.b16 %v743, %v739
    %v988 = vpack.c.b16 %v744, %v740
    %v989 = vpack.c.b16 %v745, %v741
    %v990 = vpack.c.b16 %v750, %v746
    %v991 = vpack.c.b16 %v751, %v747
    %v992 = vpack.c.b16 %v752, %v748
    %v993 = vpack.c.b16 %v753, %v749
    %v994 = vpack.c.b16 %v758, %v754
    %v995 = vpack.c.b16 %v759, %v755
    %v996 = vpack.c.b16 %v760, %v756
    %v997 = vpack.c.b16 %v761, %v757
    %v998 = vpack.c.b16 %v766, %v762
    %v999 = vpack.c.b16 %v767, %v763
    %v1000 = vpack.c.b16 %v768, %v764
    %v1001 = vpack.c.b16 %v769, %v765
    %v1002 = vpack.c.b16 %v774, %v770
    %v1003 = vpack.c.b16 %v775, %v771
    %v1004 = vpack.c.b16 %v776, %v772
    %v1005 = vpack.c.b16 %v777, %v773
    %v1006 = vpack.c.b16 %v782, %v778
    %v1007 = vpack.c.b16 %v783, %v779
    %v1008 = vpack.c.b16 %v784, %v780
    %v1009 = vpack.c.b16 %v785, %v781
    %v1010 = vpack.c.b16 %v790, %v786
    %v1011 = vpack.c.b16 %v791, %v787
    %v1012 = vpack.c.b16 %v792, %v788
    %v1013 = vpack.c.b16 %v793, %v789
    %v1014 = vpack.c.b16 %v798, %v794
    %v1015 = vpack.c.b16 %v799, %v795
    %v1016 = vpack.c.b16 %v800, %v796
    %v1017 = vpack.c.b16 %v801, %v797
    %v1018 = vpack.c.b16 %v806, %v802
    %v1019 = vpack.c.b16 %v807, %v803
    %v1020 = vpack.c.b16 %v808, %v804
    %v1021 = vpack.c.b16 %v809, %v805
    %v1022 = vpack.c.b16 %v814, %v810
    %v1023 = vpack.c.b16 %v815, %v811
    %v1024 = vpack.c.b16 %v816, %v812
    %v1025 = vpack.c.b16 %v817, %v813
    %v1026 = vpack.c.b16 %v822, %v818
    %v1027 = vpack.c.b16 %v823, %v819
    %v1028 = vpack.c.b16 %v824, %v820
    %v1029 = vpack.c.b16 %v825, %v821
    %v1030 = vpack.c.b16 %v830, %v826
    %v1031 = vpack.c.b16 %v831, %v827
    %v1032 = vpack.c.b16 %v832, %v828
    %v1033 = vpack.c.b16 %v833, %v829
    %v1034 = vpack.c.b16 %v838, %v834
    %v1035 = vpack.c.b16 %v839, %v835
    %v1036 = vpack.c.b16 %v840, %v836
    %v1037 = vpack.c.b16 %v841, %v837
    %vm1234 = vcmask 130048
    %v1236 = vsel %vm1234, %v35, 0
    %1238 = vmatprep.subr.bf16.mxu0 %v843
    %1239 = vmatpush1.bf16.msra.mxu0 %v842
    %1240 = vmatprep.subr.bf16.mxu0 %v847
    %1241 = vmatpush1.bf16.msra.mxu0 %v846
    %1242 = vmatprep.subr.bf16.mxu0 %v851
    %1243 = vmatpush1.bf16.msra.mxu0 %v850
    %1244 = vmatprep.subr.bf16.mxu0 %v855
    %1245 = vmatpush1.bf16.msra.mxu0 %v854
    %1246 = vmatprep.subr.bf16.mxu0 %v859
    %1247 = vmatpush1.bf16.msra.mxu0 %v858
    %1248 = vmatprep.subr.bf16.mxu0 %v863
    %1249 = vmatpush1.bf16.msra.mxu0 %v862
    %1250 = vmatprep.subr.bf16.mxu0 %v867
    %1251 = vmatpush1.bf16.msra.mxu0 %v866
    %1252 = vmatprep.subr.bf16.mxu0 %v871
    %1253 = vmatpush1.bf16.msra.mxu0 %v870
    %1254 = vmatprep.subr.bf16.mxu0 %v875
    %1255 = vmatpush1.bf16.msra.mxu0 %v874
    %1256 = vmatprep.subr.bf16.mxu0 %v879
    %1257 = vmatpush1.bf16.msra.mxu0 %v878
    %1258 = vmatprep.subr.bf16.mxu0 %v883
    %1259 = vmatpush1.bf16.msra.mxu0 %v882
    %1260 = vmatprep.subr.bf16.mxu0 %v887
    %1261 = vmatpush1.bf16.msra.mxu0 %v886
    %1262 = vmatprep.subr.bf16.mxu0 %v891
    %1263 = vmatpush1.bf16.msra.mxu0 %v890
    %1264 = vmatprep.subr.bf16.mxu0 %v895
    %1265 = vmatpush1.bf16.msra.mxu0 %v894
    %1266 = vmatprep.subr.bf16.mxu0 %v899
    %1267 = vmatpush1.bf16.msra.mxu0 %v898
    %1268 = vmatprep.subr.bf16.mxu0 %v903
    %1269 = vmatpush1.bf16.msra.mxu0 %v902
    %1270 = vmatprep.mubr.bf16.mxu0 %v30
    %1271 = vmatmul.mubr.bf16.gmra.mrb[0].mxu0 %v29
    %v1272 = vpop.f32.mrb[0].mxu0
    %v1273 = vadd.f32 %v237, %v1272
    %v1274 = vpop.f32.mrb[0].mxu0
    %v1275 = vadd.f32 %v241, %v1274
    %v1276 = vpop.f32.mrb[0].mxu0
    %v1277 = vpop.f32.mrb[0].mxu0
    %1278 = vdwg.mxu0
    %1279 = vmatprep.subr.bf16.mxu0 %v907
    %1280 = vmatpush1.bf16.msra.mxu0 %v906
    %1281 = vmatprep.subr.bf16.mxu0 %v911
    %1282 = vmatpush1.bf16.msra.mxu0 %v910
    %1283 = vmatprep.subr.bf16.mxu0 %v915
    %1284 = vmatpush1.bf16.msra.mxu0 %v914
    %1285 = vmatprep.subr.bf16.mxu0 %v919
    %1286 = vmatpush1.bf16.msra.mxu0 %v918
    %1287 = vmatprep.subr.bf16.mxu0 %v923
    %1288 = vmatpush1.bf16.msra.mxu0 %v922
    %1289 = vmatprep.subr.bf16.mxu0 %v927
    %1290 = vmatpush1.bf16.msra.mxu0 %v926
    %1291 = vmatprep.subr.bf16.mxu0 %v931
    %1292 = vmatpush1.bf16.msra.mxu0 %v930
    %1293 = vmatprep.subr.bf16.mxu0 %v935
    %1294 = vmatpush1.bf16.msra.mxu0 %v934
    %1295 = vmatprep.subr.bf16.mxu0 %v939
    %1296 = vmatpush1.bf16.msra.mxu0 %v938
    %1297 = vmatprep.subr.bf16.mxu0 %v943
    %1298 = vmatpush1.bf16.msra.mxu0 %v942
    %1299 = vmatprep.subr.bf16.mxu0 %v947
    %1300 = vmatpush1.bf16.msra.mxu0 %v946
    %1301 = vmatprep.subr.bf16.mxu0 %v951
    %1302 = vmatpush1.bf16.msra.mxu0 %v950
    %1303 = vmatprep.subr.bf16.mxu0 %v955
    %1304 = vmatpush1.bf16.msra.mxu0 %v954
    %1305 = vmatprep.subr.bf16.mxu0 %v959
    %1306 = vmatpush1.bf16.msra.mxu0 %v958
    %1307 = vmatprep.subr.bf16.mxu0 %v963
    %1308 = vmatpush1.bf16.msra.mxu0 %v962
    %1309 = vmatprep.subr.bf16.mxu0 %v967
    %1310 = vmatpush1.bf16.msra.mxu0 %v966
    %1311 = vmatprep.mubr.bf16.mxu0 %v32
    %1312 = vmatmul.mubr.bf16.gmra.mrb[0].mxu0 %v31
    %v1313 = vpop.f32.mrb[0].mxu0
    %v1314 = vadd.f32 %v1273, %v1313
    %v1315 = vpop.f32.mrb[0].mxu0
    %v1316 = vadd.f32 %v1275, %v1315
    %v1317 = vpop.f32.mrb[0].mxu0
    %v1318 = vpop.f32.mrb[0].mxu0
    %1319 = vdwg.mxu0
    %1320 = vmatprep.subr.bf16.mxu0 %v971
    %1321 = vmatpush1.bf16.msra.mxu0 %v970
    %1322 = vmatprep.subr.bf16.mxu0 %v975
    %1323 = vmatpush1.bf16.msra.mxu0 %v974
    %1324 = vmatprep.subr.bf16.mxu0 %v979
    %1325 = vmatpush1.bf16.msra.mxu0 %v978
    %1326 = vmatprep.subr.bf16.mxu0 %v983
    %1327 = vmatpush1.bf16.msra.mxu0 %v982
    %1328 = vmatprep.subr.bf16.mxu0 %v987
    %1329 = vmatpush1.bf16.msra.mxu0 %v986
    %1330 = vmatprep.subr.bf16.mxu0 %v991
    %1331 = vmatpush1.bf16.msra.mxu0 %v990
    %1332 = vmatprep.subr.bf16.mxu0 %v995
    %1333 = vmatpush1.bf16.msra.mxu0 %v994
    %1334 = vmatprep.subr.bf16.mxu0 %v999
    %1335 = vmatpush1.bf16.msra.mxu0 %v998
    %1336 = vmatprep.subr.bf16.mxu0 %v1003
    %1337 = vmatpush1.bf16.msra.mxu0 %v1002
    %1338 = vmatprep.subr.bf16.mxu0 %v1007
    %1339 = vmatpush1.bf16.msra.mxu0 %v1006
    %1340 = vmatprep.subr.bf16.mxu0 %v1011
    %1341 = vmatpush1.bf16.msra.mxu0 %v1010
    %1342 = vmatprep.subr.bf16.mxu0 %v1015
    %1343 = vmatpush1.bf16.msra.mxu0 %v1014
    %1344 = vmatprep.subr.bf16.mxu0 %v1019
    %1345 = vmatpush1.bf16.msra.mxu0 %v1018
    %1346 = vmatprep.subr.bf16.mxu0 %v1023
    %1347 = vmatpush1.bf16.msra.mxu0 %v1022
    %1348 = vmatprep.subr.bf16.mxu0 %v1027
    %1349 = vmatpush1.bf16.msra.mxu0 %v1026
    %1350 = vmatprep.subr.bf16.mxu0 %v1031
    %1351 = vmatpush1.bf16.msra.mxu0 %v1030
    %1352 = vmatprep.mubr.bf16.mxu0 %v34
    %1353 = vmatmul.mubr.bf16.gmra.mrb[0].mxu0 %v33
    %v1354 = vpop.f32.mrb[0].mxu0
    %v1355 = vadd.f32 %v1314, %v1354
    %v1356 = vpop.f32.mrb[0].mxu0
    %v1357 = vadd.f32 %v1316, %v1356
    %v1358 = vpop.f32.mrb[0].mxu0
    %v1359 = vpop.f32.mrb[0].mxu0
    %1360 = vdwg.mxu0
    %1361 = vmatprep.subr.bf16.mxu0 %v1035
    %1362 = vmatpush1.bf16.msra.mxu0 %v1034
    %1363 = vmatprep.subr.bf16.mxu0 0
    %1364 = vmatpush1.bf16.msra.mxu0 0
    %1365 = vmatprep.subr.bf16.mxu0 0
    %1366 = vmatpush1.bf16.msra.mxu0 0
    %1367 = vmatprep.subr.bf16.mxu0 0
    %1368 = vmatpush1.bf16.msra.mxu0 0
    %1369 = vmatprep.subr.bf16.mxu0 0
    %1370 = vmatpush1.bf16.msra.mxu0 0
    %1371 = vmatprep.subr.bf16.mxu0 0
    %1372 = vmatpush1.bf16.msra.mxu0 0
    %1373 = vmatprep.subr.bf16.mxu0 0
    %1374 = vmatpush1.bf16.msra.mxu0 0
    %1375 = vmatprep.subr.bf16.mxu0 0
    %1376 = vmatpush1.bf16.msra.mxu0 0
    %1377 = vmatprep.subr.bf16.mxu0 0
    %1378 = vmatpush1.bf16.msra.mxu0 0
    %1379 = vmatprep.subr.bf16.mxu0 0
    %1380 = vmatpush1.bf16.msra.mxu0 0
    %1381 = vmatprep.subr.bf16.mxu0 0
    %1382 = vmatpush1.bf16.msra.mxu0 0
    %1383 = vmatprep.subr.bf16.mxu0 0
    %1384 = vmatpush1.bf16.msra.mxu0 0
    %1385 = vmatprep.subr.bf16.mxu0 0
    %1386 = vmatpush1.bf16.msra.mxu0 0
    %1387 = vmatprep.subr.bf16.mxu0 0
    %1388 = vmatpush1.bf16.msra.mxu0 0
    %1389 = vmatprep.subr.bf16.mxu0 0
    %1390 = vmatpush1.bf16.msra.mxu0 0
    %1391 = vmatprep.subr.bf16.mxu0 0
    %1392 = vmatpush1.bf16.msra.mxu0 0
    %1393 = vmatprep.mubr.bf16.mxu0 0
    %1394 = vmatmul.mubr.bf16.gmra.mrb[0].mxu0 %v1236
    %v1395 = vpop.f32.mrb[0].mxu0
    %v1396 = vadd.f32 %v1355, %v1395
    %v1397 = vpop.f32.mrb[0].mxu0
    %v1398 = vadd.f32 %v1357, %v1397
    %v1399 = vpop.f32.mrb[0].mxu0
    %v1400 = vpop.f32.mrb[0].mxu0
    %1401 = vdwg.mxu0
    %1402 = vmatprep.subr.bf16.mxu0 %v845
    %1403 = vmatpush1.bf16.msra.mxu0 %v844
    %1404 = vmatprep.subr.bf16.mxu0 %v849
    %1405 = vmatpush1.bf16.msra.mxu0 %v848
    %1406 = vmatprep.subr.bf16.mxu0 %v853
    %1407 = vmatpush1.bf16.msra.mxu0 %v852
    %1408 = vmatprep.subr.bf16.mxu0 %v857
    %1409 = vmatpush1.bf16.msra.mxu0 %v856
    %1410 = vmatprep.subr.bf16.mxu0 %v861
    %1411 = vmatpush1.bf16.msra.mxu0 %v860
    %1412 = vmatprep.subr.bf16.mxu0 %v865
    %1413 = vmatpush1.bf16.msra.mxu0 %v864
    %1414 = vmatprep.subr.bf16.mxu0 %v869
    %1415 = vmatpush1.bf16.msra.mxu0 %v868
    %1416 = vmatprep.subr.bf16.mxu0 %v873
    %1417 = vmatpush1.bf16.msra.mxu0 %v872
    %1418 = vmatprep.subr.bf16.mxu0 %v877
    %1419 = vmatpush1.bf16.msra.mxu0 %v876
    %1420 = vmatprep.subr.bf16.mxu0 %v881
    %1421 = vmatpush1.bf16.msra.mxu0 %v880
    %1422 = vmatprep.subr.bf16.mxu0 %v885
    %1423 = vmatpush1.bf16.msra.mxu0 %v884
    %1424 = vmatprep.subr.bf16.mxu0 %v889
    %1425 = vmatpush1.bf16.msra.mxu0 %v888
    %1426 = vmatprep.subr.bf16.mxu0 %v893
    %1427 = vmatpush1.bf16.msra.mxu0 %v892
    %1428 = vmatprep.subr.bf16.mxu0 %v897
    %1429 = vmatpush1.bf16.msra.mxu0 %v896
    %1430 = vmatprep.subr.bf16.mxu0 %v901
    %1431 = vmatpush1.bf16.msra.mxu0 %v900
    %1432 = vmatprep.subr.bf16.mxu0 %v905
    %1433 = vmatpush1.bf16.msra.mxu0 %v904
    %1434 = vmatprep.mubr.bf16.mxu0 %v30
    %1435 = vmatmul.mubr.bf16.gmra.mrb[0].mxu0 %v29
    %v1436 = vpop.f32.mrb[0].mxu0
    %v1437 = vadd.f32 %v245, %v1436
    %v1438 = vpop.f32.mrb[0].mxu0
    %v1439 = vadd.f32 %v249, %v1438
    %v1440 = vpop.f32.mrb[0].mxu0
    %v1441 = vpop.f32.mrb[0].mxu0
    %1442 = vdwg.mxu0
    %1443 = vmatprep.subr.bf16.mxu0 %v909
    %1444 = vmatpush1.bf16.msra.mxu0 %v908
    %1445 = vmatprep.subr.bf16.mxu0 %v913
    %1446 = vmatpush1.bf16.msra.mxu0 %v912
    %1447 = vmatprep.subr.bf16.mxu0 %v917
    %1448 = vmatpush1.bf16.msra.mxu0 %v916
    %1449 = vmatprep.subr.bf16.mxu0 %v921
    %1450 = vmatpush1.bf16.msra.mxu0 %v920
    %1451 = vmatprep.subr.bf16.mxu0 %v925
    %1452 = vmatpush1.bf16.msra.mxu0 %v924
    %1453 = vmatprep.subr.bf16.mxu0 %v929
    %1454 = vmatpush1.bf16.msra.mxu0 %v928
    %1455 = vmatprep.subr.bf16.mxu0 %v933
    %1456 = vmatpush1.bf16.msra.mxu0 %v932
    %1457 = vmatprep.subr.bf16.mxu0 %v937
    %1458 = vmatpush1.bf16.msra.mxu0 %v936
    %1459 = vmatprep.subr.bf16.mxu0 %v941
    %1460 = vmatpush1.bf16.msra.mxu0 %v940
    %1461 = vmatprep.subr.bf16.mxu0 %v945
    %1462 = vmatpush1.bf16.msra.mxu0 %v944
    %1463 = vmatprep.subr.bf16.mxu0 %v949
    %1464 = vmatpush1.bf16.msra.mxu0 %v948
    %1465 = vmatprep.subr.bf16.mxu0 %v953
    %1466 = vmatpush1.bf16.msra.mxu0 %v952
    %1467 = vmatprep.subr.bf16.mxu0 %v957
    %1468 = vmatpush1.bf16.msra.mxu0 %v956
    %1469 = vmatprep.subr.bf16.mxu0 %v961
    %1470 = vmatpush1.bf16.msra.mxu0 %v960
    %1471 = vmatprep.subr.bf16.mxu0 %v965
    %1472 = vmatpush1.bf16.msra.mxu0 %v964
    %1473 = vmatprep.subr.bf16.mxu0 %v969
    %1474 = vmatpush1.bf16.msra.mxu0 %v968
    %1475 = vmatprep.mubr.bf16.mxu0 %v32
    %1476 = vmatmul.mubr.bf16.gmra.mrb[0].mxu0 %v31
    %v1477 = vpop.f32.mrb[0].mxu0
    %v1478 = vadd.f32 %v1437, %v1477
    %v1479 = vpop.f32.mrb[0].mxu0
    %v1480 = vadd.f32 %v1439, %v1479
    %v1481 = vpop.f32.mrb[0].mxu0
    %v1482 = vpop.f32.mrb[0].mxu0
    %1483 = vdwg.mxu0
    %1484 = vmatprep.subr.bf16.mxu0 %v973
    %1485 = vmatpush1.bf16.msra.mxu0 %v972
    %1486 = vmatprep.subr.bf16.mxu0 %v977
    %1487 = vmatpush1.bf16.msra.mxu0 %v976
    %1488 = vmatprep.subr.bf16.mxu0 %v981
    %1489 = vmatpush1.bf16.msra.mxu0 %v980
    %1490 = vmatprep.subr.bf16.mxu0 %v985
    %1491 = vmatpush1.bf16.msra.mxu0 %v984
    %1492 = vmatprep.subr.bf16.mxu0 %v989
    %1493 = vmatpush1.bf16.msra.mxu0 %v988
    %1494 = vmatprep.subr.bf16.mxu0 %v993
    %1495 = vmatpush1.bf16.msra.mxu0 %v992
    %1496 = vmatprep.subr.bf16.mxu0 %v997
    %1497 = vmatpush1.bf16.msra.mxu0 %v996
    %1498 = vmatprep.subr.bf16.mxu0 %v1001
    %1499 = vmatpush1.bf16.msra.mxu0 %v1000
    %1500 = vmatprep.subr.bf16.mxu0 %v1005
    %1501 = vmatpush1.bf16.msra.mxu0 %v1004
    %1502 = vmatprep.subr.bf16.mxu0 %v1009
    %1503 = vmatpush1.bf16.msra.mxu0 %v1008
    %1504 = vmatprep.subr.bf16.mxu0 %v1013
    %1505 = vmatpush1.bf16.msra.mxu0 %v1012
    %1506 = vmatprep.subr.bf16.mxu0 %v1017
    %1507 = vmatpush1.bf16.msra.mxu0 %v1016
    %1508 = vmatprep.subr.bf16.mxu0 %v1021
    %1509 = vmatpush1.bf16.msra.mxu0 %v1020
    %1510 = vmatprep.subr.bf16.mxu0 %v1025
    %1511 = vmatpush1.bf16.msra.mxu0 %v1024
    %1512 = vmatprep.subr.bf16.mxu0 %v1029
    %1513 = vmatpush1.bf16.msra.mxu0 %v1028
    %1514 = vmatprep.subr.bf16.mxu0 %v1033
    %1515 = vmatpush1.bf16.msra.mxu0 %v1032
    %1516 = vmatprep.mubr.bf16.mxu0 %v34
    %1517 = vmatmul.mubr.bf16.gmra.mrb[0].mxu0 %v33
    %v1518 = vpop.f32.mrb[0].mxu0
    %v1519 = vadd.f32 %v1478, %v1518
    %v1520 = vpop.f32.mrb[0].mxu0
    %v1521 = vadd.f32 %v1480, %v1520
    %v1522 = vpop.f32.mrb[0].mxu0
    %v1523 = vpop.f32.mrb[0].mxu0
    %1524 = vdwg.mxu0
    %1525 = vmatprep.subr.bf16.mxu0 %v1037
    %1526 = vmatpush1.bf16.msra.mxu0 %v1036
    %1527 = vmatprep.subr.bf16.mxu0 0
    %1528 = vmatpush1.bf16.msra.mxu0 0
    %1529 = vmatprep.subr.bf16.mxu0 0
    %1530 = vmatpush1.bf16.msra.mxu0 0
    %1531 = vmatprep.subr.bf16.mxu0 0
    %1532 = vmatpush1.bf16.msra.mxu0 0
    %1533 = vmatprep.subr.bf16.mxu0 0
    %1534 = vmatpush1.bf16.msra.mxu0 0
    %1535 = vmatprep.subr.bf16.mxu0 0
    %1536 = vmatpush1.bf16.msra.mxu0 0
    %1537 = vmatprep.subr.bf16.mxu0 0
    %1538 = vmatpush1.bf16.msra.mxu0 0
    %1539 = vmatprep.subr.bf16.mxu0 0
    %1540 = vmatpush1.bf16.msra.mxu0 0
    %1541 = vmatprep.subr.bf16.mxu0 0
    %1542 = vmatpush1.bf16.msra.mxu0 0
    %1543 = vmatprep.subr.bf16.mxu0 0
    %1544 = vmatpush1.bf16.msra.mxu0 0
    %1545 = vmatprep.subr.bf16.mxu0 0
    %1546 = vmatpush1.bf16.msra.mxu0 0
    %1547 = vmatprep.subr.bf16.mxu0 0
    %1548 = vmatpush1.bf16.msra.mxu0 0
    %1549 = vmatprep.subr.bf16.mxu0 0
    %1550 = vmatpush1.bf16.msra.mxu0 0
    %1551 = vmatprep.subr.bf16.mxu0 0
    %1552 = vmatpush1.bf16.msra.mxu0 0
    %1553 = vmatprep.subr.bf16.mxu0 0
    %1554 = vmatpush1.bf16.msra.mxu0 0
    %1555 = vmatprep.subr.bf16.mxu0 0
    %1556 = vmatpush1.bf16.msra.mxu0 0
    %1557 = vmatprep.mubr.bf16.mxu0 0
    %1558 = vmatmul.mubr.bf16.gmra.mrb[0].mxu0 %v1236
    %v1559 = vpop.f32.mrb[0].mxu0
    %v1560 = vadd.f32 %v1519, %v1559
    %v1561 = vpop.f32.mrb[0].mxu0
    %v1562 = vadd.f32 %v1521, %v1561
    %v1563 = vpop.f32.mrb[0].mxu0
    %v1564 = vpop.f32.mrb[0].mxu0
    %1565 = vdwg.mxu0
    %v1566 = vmax.f32 %v1396, 0.0
    %v1567 = vmax.f32 %v1398, 0.0
    %v1568 = vmax.f32 %v1560, 0.0
    %v1569 = vmax.f32 %v1562, 0.0
    %v1570 = vpack.c.bf16 %v1566, %v1566
    %v1571 = vpack.c.bf16 %v1567, %v1567
    %v1572 = vpack.c.bf16 %v1568, %v1568
    %v1573 = vpack.c.bf16 %v1569, %v1569
    %v1574 = vld [vmem:[%s3] sm:$0xf]
    %v1575 = vld [vmem:[%s3 + $0x4] sm:$0xf]
    %v1576 = vld [vmem:[%s3 + $0x8] sm:$0xf]
    %v1577 = vld [vmem:[%s3 + $0xc] sm:$0xf]
    %v1578 = vld [vmem:[%s3 + $0x10] sm:$0xf]
    %v1579 = vld [vmem:[%s3 + $0x14] sm:$0xf]
    %v1580 = vld [vmem:[%s3 + $0x18] sm:$0xf]
    %v1581 = vld [vmem:[%s3 + $0x1c] sm:$0xf]
    %v1582 = vld [vmem:[%s3 + $0x20] sm:$0xf]
    %v1583 = vld [vmem:[%s3 + $0x24] sm:$0xf]
    %v1584 = vld [vmem:[%s3 + $0x28] sm:$0xf]
    %v1585 = vld [vmem:[%s3 + $0x2c] sm:$0xf]
    %v1586 = vld [vmem:[%s3 + $0x30] sm:$0xf]
    %v1587 = vld [vmem:[%s3 + $0x34] sm:$0xf]
    %v1588 = vld [vmem:[%s3 + $0x38] sm:$0xf]
    %v1589 = vld [vmem:[%s3 + $0x3c] sm:$0xf]
    %v1590 = vld [vmem:[%s3 + $0x40] sm:$0xf]
    %v1591 = vld [vmem:[%s3 + $0x44] sm:$0xf]
    %v1592 = vld [vmem:[%s3 + $0x48] sm:$0xf]
    %v1593 = vld [vmem:[%s3 + $0x4c] sm:$0xf]
    %v1594 = vld [vmem:[%s3 + $0x50] sm:$0xf]
    %v1595 = vld [vmem:[%s3 + $0x54] sm:$0xf]
    %v1596 = vld [vmem:[%s3 + $0x58] sm:$0xf]
    %v1597 = vld [vmem:[%s3 + $0x5c] sm:$0xf]
    %v1598 = vld [vmem:[%s3 + $0x60] sm:$0xf]
    %v1599 = vld [vmem:[%s3 + $0x64] sm:$0xf]
    %v1600 = vld [vmem:[%s3 + $0x68] sm:$0xf]
    %v1601 = vld [vmem:[%s3 + $0x6c] sm:$0xf]
    %v1602 = vld [vmem:[%s3 + $0x70] sm:$0xf]
    %v1603 = vld [vmem:[%s3 + $0x74] sm:$0xf]
    %v1604 = vld [vmem:[%s3 + $0x78] sm:$0xf]
    %v1605 = vld [vmem:[%s3 + $0x7c] sm:$0xf]
    %v1606 = vld [vmem:[%s3 + $0x80] sm:$0xf]
    %v1607 = vld [vmem:[%s3 + $0x84] sm:$0xf]
    %v1608 = vld [vmem:[%s3 + $0x88] sm:$0xf]
    %v1609 = vld [vmem:[%s3 + $0x8c] sm:$0xf]
    %v1610 = vld [vmem:[%s3 + $0x90] sm:$0xf]
    %v1611 = vld [vmem:[%s3 + $0x94] sm:$0xf]
    %v1612 = vld [vmem:[%s3 + $0x98] sm:$0xf]
    %v1613 = vld [vmem:[%s3 + $0x9c] sm:$0xf]
    %v1614 = vld [vmem:[%s3 + $0xa0] sm:$0xf]
    %v1615 = vld [vmem:[%s3 + $0xa4] sm:$0xf]
    %v1616 = vld [vmem:[%s3 + $0xa8] sm:$0xf]
    %v1617 = vld [vmem:[%s3 + $0xac] sm:$0xf]
    %v1618 = vld [vmem:[%s3 + $0xb0] sm:$0xf]
    %v1619 = vld [vmem:[%s3 + $0xb4] sm:$0xf]
    %v1620 = vld [vmem:[%s3 + $0xb8] sm:$0xf]
    %v1621 = vld [vmem:[%s3 + $0xbc] sm:$0xf]
    %v1622 = vld [vmem:[%s3 + $0xc0] sm:$0xf]
    %v1623 = vld [vmem:[%s3 + $0xc4] sm:$0xf]
    %v1624 = vld [vmem:[%s3 + $0xc8] sm:$0xf]
    %v1625 = vld [vmem:[%s3 + $0xcc] sm:$0xf]
    %v1626 = vld [vmem:[%s3 + $0xd0] sm:$0xf]
    %v1627 = vld [vmem:[%s3 + $0xd4] sm:$0xf]
    %v1628 = vld [vmem:[%s3 + $0xd8] sm:$0xf]
    %v1629 = vld [vmem:[%s3 + $0xdc] sm:$0xf]
    %v1630 = vld [vmem:[%s3 + $0xe0] sm:$0xf]
    %v1631 = vld [vmem:[%s3 + $0xe4] sm:$0xf]
    %v1632 = vld [vmem:[%s3 + $0xe8] sm:$0xf]
    %v1633 = vld [vmem:[%s3 + $0xec] sm:$0xf]
    %v1634 = vld [vmem:[%s3 + $0xf0] sm:$0xf]
    %v1635 = vld [vmem:[%s3 + $0xf4] sm:$0xf]
    %v1636 = vld [vmem:[%s3 + $0xf8] sm:$0xf]
    %v1637 = vld [vmem:[%s3 + $0xfc] sm:$0xf]
    %v1638 = vld [vmem:[%s4] sm:$0x1]
    %v1640 = vlaneseq
    %v1641 = vshrl.u32 %v1640, 7
    %v1642 = vsub.s32 0, %v1641
    %v1643 = vrot.slane %v1638, %v1642
    %v1709 = vunpack.c.l.b16 %v1574
    %v1710 = vunpack.c.l.b16 %v1575
    %v1711 = vunpack.c.l.b16 %v1576
    %v1712 = vunpack.c.l.b16 %v1577
    %v1713 = vunpack.c.l.b16 %v1578
    %v1714 = vunpack.c.l.b16 %v1579
    %v1715 = vunpack.c.l.b16 %v1580
    %v1716 = vunpack.c.l.b16 %v1581
    %v1717 = vunpack.c.l.b16 %v1582
    %v1718 = vunpack.c.l.b16 %v1583
    %v1719 = vunpack.c.l.b16 %v1584
    %v1720 = vunpack.c.l.b16 %v1585
    %v1721 = vunpack.c.l.b16 %v1586
    %v1722 = vunpack.c.l.b16 %v1587
    %v1723 = vunpack.c.l.b16 %v1588
    %v1724 = vunpack.c.l.b16 %v1589
    %v1725 = vunpack.c.l.b16 %v1590
    %v1726 = vunpack.c.l.b16 %v1591
    %v1727 = vunpack.c.l.b16 %v1592
    %v1728 = vunpack.c.l.b16 %v1593
    %v1729 = vunpack.c.l.b16 %v1594
    %v1730 = vunpack.c.l.b16 %v1595
    %v1731 = vunpack.c.l.b16 %v1596
    %v1732 = vunpack.c.l.b16 %v1597
    %v1733 = vunpack.c.l.b16 %v1598
    %v1734 = vunpack.c.l.b16 %v1599
    %v1735 = vunpack.c.l.b16 %v1600
    %v1736 = vunpack.c.l.b16 %v1601
    %v1737 = vunpack.c.l.b16 %v1602
    %v1738 = vunpack.c.l.b16 %v1603
    %v1739 = vunpack.c.l.b16 %v1604
    %v1740 = vunpack.c.l.b16 %v1605
    %v1741 = vunpack.c.l.b16 %v1606
    %v1742 = vunpack.c.l.b16 %v1607
    %v1743 = vunpack.c.l.b16 %v1608
    %v1744 = vunpack.c.l.b16 %v1609
    %v1745 = vunpack.c.l.b16 %v1610
    %v1746 = vunpack.c.l.b16 %v1611
    %v1747 = vunpack.c.l.b16 %v1612
    %v1748 = vunpack.c.l.b16 %v1613
    %v1749 = vunpack.c.l.b16 %v1614
    %v1750 = vunpack.c.l.b16 %v1615
    %v1751 = vunpack.c.l.b16 %v1616
    %v1752 = vunpack.c.l.b16 %v1617
    %v1753 = vunpack.c.l.b16 %v1618
    %v1754 = vunpack.c.l.b16 %v1619
    %v1755 = vunpack.c.l.b16 %v1620
    %v1756 = vunpack.c.l.b16 %v1621
    %v1757 = vunpack.c.l.b16 %v1622
    %v1758 = vunpack.c.l.b16 %v1623
    %v1759 = vunpack.c.l.b16 %v1624
    %v1760 = vunpack.c.l.b16 %v1625
    %v1761 = vunpack.c.l.b16 %v1626
    %v1762 = vunpack.c.l.b16 %v1627
    %v1763 = vunpack.c.l.b16 %v1628
    %v1764 = vunpack.c.l.b16 %v1629
    %v1765 = vunpack.c.l.b16 %v1630
    %v1766 = vunpack.c.l.b16 %v1631
    %v1767 = vunpack.c.l.b16 %v1632
    %v1768 = vunpack.c.l.b16 %v1633
    %v1769 = vunpack.c.l.b16 %v1634
    %v1770 = vunpack.c.l.b16 %v1635
    %v1771 = vunpack.c.l.b16 %v1636
    %v1772 = vunpack.c.l.b16 %v1637
    %v1773 = vpack.c.b16 %v1710, %v1709
    %v1774 = vpack.c.b16 %v1712, %v1711
    %v1775 = vpack.c.b16 %v1714, %v1713
    %v1776 = vpack.c.b16 %v1716, %v1715
    %v1777 = vpack.c.b16 %v1718, %v1717
    %v1778 = vpack.c.b16 %v1720, %v1719
    %v1779 = vpack.c.b16 %v1722, %v1721
    %v1780 = vpack.c.b16 %v1724, %v1723
    %v1781 = vpack.c.b16 %v1726, %v1725
    %v1782 = vpack.c.b16 %v1728, %v1727
    %v1783 = vpack.c.b16 %v1730, %v1729
    %v1784 = vpack.c.b16 %v1732, %v1731
    %v1785 = vpack.c.b16 %v1734, %v1733
    %v1786 = vpack.c.b16 %v1736, %v1735
    %v1787 = vpack.c.b16 %v1738, %v1737
    %v1788 = vpack.c.b16 %v1740, %v1739
    %v1789 = vpack.c.b16 %v1742, %v1741
    %v1790 = vpack.c.b16 %v1744, %v1743
    %v1791 = vpack.c.b16 %v1746, %v1745
    %v1792 = vpack.c.b16 %v1748, %v1747
    %v1793 = vpack.c.b16 %v1750, %v1749
    %v1794 = vpack.c.b16 %v1752, %v1751
    %v1795 = vpack.c.b16 %v1754, %v1753
    %v1796 = vpack.c.b16 %v1756, %v1755
    %v1797 = vpack.c.b16 %v1758, %v1757
    %v1798 = vpack.c.b16 %v1760, %v1759
    %v1799 = vpack.c.b16 %v1762, %v1761
    %v1800 = vpack.c.b16 %v1764, %v1763
    %v1801 = vpack.c.b16 %v1766, %v1765
    %v1802 = vpack.c.b16 %v1768, %v1767
    %v1803 = vpack.c.b16 %v1770, %v1769
    %v1804 = vpack.c.b16 %v1772, %v1771
    %1837 = vmatprep.subr.bf16.mxu0 0
    %1838 = vmatpush1.bf16.msra.mxu0 %v1773
    %1839 = vmatprep.subr.bf16.mxu0 0
    %1840 = vmatpush1.bf16.msra.mxu0 %v1774
    %1841 = vmatprep.subr.bf16.mxu0 0
    %1842 = vmatpush1.bf16.msra.mxu0 %v1775
    %1843 = vmatprep.subr.bf16.mxu0 0
    %1844 = vmatpush1.bf16.msra.mxu0 %v1776
    %1845 = vmatprep.subr.bf16.mxu0 0
    %1846 = vmatpush1.bf16.msra.mxu0 %v1777
    %1847 = vmatprep.subr.bf16.mxu0 0
    %1848 = vmatpush1.bf16.msra.mxu0 %v1778
    %1849 = vmatprep.subr.bf16.mxu0 0
    %1850 = vmatpush1.bf16.msra.mxu0 %v1779
    %1851 = vmatprep.subr.bf16.mxu0 0
    %1852 = vmatpush1.bf16.msra.mxu0 %v1780
    %1853 = vmatprep.subr.bf16.mxu0 0
    %1854 = vmatpush1.bf16.msra.mxu0 %v1781
    %1855 = vmatprep.subr.bf16.mxu0 0
    %1856 = vmatpush1.bf16.msra.mxu0 %v1782
    %1857 = vmatprep.subr.bf16.mxu0 0
    %1858 = vmatpush1.bf16.msra.mxu0 %v1783
    %1859 = vmatprep.subr.bf16.mxu0 0
    %1860 = vmatpush1.bf16.msra.mxu0 %v1784
    %1861 = vmatprep.subr.bf16.mxu0 0
    %1862 = vmatpush1.bf16.msra.mxu0 %v1785
    %1863 = vmatprep.subr.bf16.mxu0 0
    %1864 = vmatpush1.bf16.msra.mxu0 %v1786
    %1865 = vmatprep.subr.bf16.mxu0 0
    %1866 = vmatpush1.bf16.msra.mxu0 %v1787
    %1867 = vmatprep.subr.bf16.mxu0 0
    %1868 = vmatpush1.bf16.msra.mxu0 %v1788
    %1869 = vmatprep.mubr.bf16.mxu0 %v1571
    %1870 = vmatmul.mubr.bf16.gmra.mrb[0].mxu0 %v1570
    %v1871 = vpop.f32.mrb[0].mxu0
    %v1872 = vadd.f32 %v1643, %v1871
    %v1873 = vpop.f32.mrb[0].mxu0
    %v1874 = vpop.f32.mrb[0].mxu0
    %v1875 = vpop.f32.mrb[0].mxu0
    %1876 = vdwg.mxu0
    %1877 = vmatprep.subr.bf16.mxu0 0
    %1878 = vmatpush1.bf16.msra.mxu0 %v1789
    %1879 = vmatprep.subr.bf16.mxu0 0
    %1880 = vmatpush1.bf16.msra.mxu0 %v1790
    %1881 = vmatprep.subr.bf16.mxu0 0
    %1882 = vmatpush1.bf16.msra.mxu0 %v1791
    %1883 = vmatprep.subr.bf16.mxu0 0
    %1884 = vmatpush1.bf16.msra.mxu0 %v1792
    %1885 = vmatprep.subr.bf16.mxu0 0
    %1886 = vmatpush1.bf16.msra.mxu0 %v1793
    %1887 = vmatprep.subr.bf16.mxu0 0
    %1888 = vmatpush1.bf16.msra.mxu0 %v1794
    %1889 = vmatprep.subr.bf16.mxu0 0
    %1890 = vmatpush1.bf16.msra.mxu0 %v1795
    %1891 = vmatprep.subr.bf16.mxu0 0
    %1892 = vmatpush1.bf16.msra.mxu0 %v1796
    %1893 = vmatprep.subr.bf16.mxu0 0
    %1894 = vmatpush1.bf16.msra.mxu0 %v1797
    %1895 = vmatprep.subr.bf16.mxu0 0
    %1896 = vmatpush1.bf16.msra.mxu0 %v1798
    %1897 = vmatprep.subr.bf16.mxu0 0
    %1898 = vmatpush1.bf16.msra.mxu0 %v1799
    %1899 = vmatprep.subr.bf16.mxu0 0
    %1900 = vmatpush1.bf16.msra.mxu0 %v1800
    %1901 = vmatprep.subr.bf16.mxu0 0
    %1902 = vmatpush1.bf16.msra.mxu0 %v1801
    %1903 = vmatprep.subr.bf16.mxu0 0
    %1904 = vmatpush1.bf16.msra.mxu0 %v1802
    %1905 = vmatprep.subr.bf16.mxu0 0
    %1906 = vmatpush1.bf16.msra.mxu0 %v1803
    %1907 = vmatprep.subr.bf16.mxu0 0
    %1908 = vmatpush1.bf16.msra.mxu0 %v1804
    %1909 = vmatprep.mubr.bf16.mxu0 %v1573
    %1910 = vmatmul.mubr.bf16.gmra.mrb[0].mxu0 %v1572
    %v1911 = vpop.f32.mrb[0].mxu0
    %v1912 = vadd.f32 %v1872, %v1911
    %v1913 = vpop.f32.mrb[0].mxu0
    %v1914 = vpop.f32.mrb[0].mxu0
    %v1915 = vpop.f32.mrb[0].mxu0
    %1916 = vdwg.mxu0
    %vm1917 = vcmask 80896
    %v1918 = vsel %vm1917, %v1912, -inf
    %1919 = vmax.xlane.f32.xlu0 %v1918
    %v1920 = vpop.xlane.xlu0 %1919
    %v1921 = vsub.f32 %v1912, %v1920
    %v1922 = vmul.f32 %v1921, 1.442695
    %v1923 = vpow.pop %v1922
    %v1924 = vsel %vm1917, %v1923, 0.0
    %1925 = vadd.xlane.f32.xlu0 %v1924
    %v1926 = vpop.xlane.xlu0 %1925
    %v1927 = vrcp.pop %v1926
    %v1928 = vmul.f32 %v1923, %v1927
    %1929 = vst.msk [vmem:[#allocation2] sm:$0xff] %vm1917, %v1928
    // Predicated region
    $region22: #{network_forward.1} parent=1 // pred_check
      _
    $region23: #{network_forward.1} parent=1 // pred_check_branch
      %1931 = sbr.rel (0) target = $region25
    $region24: #{network_forward.1} parent=1 // pred_region
      %s1933 = ssub.s32 128, 128
      %1934 = vsyncadd [#allocation3], %s1933
      %s1936 = sshll.u32 [#allocation2], 4
      %s1937 = int_to_ptr.vmem [resolvable:$true] %s1936
      %1939 = dma.vmem_to_hbm [thread:$0]  %s1937, 128, %s5, [#allocation3]
    $region25: #{network_forward.1} parent=1 // pred_fallthru
      _
    // Predicated region
    $region26: #{network_forward.1} parent=1 // pred_check
      _
    $region27: #{network_forward.1} parent=1 // pred_check_branch
      %1941 = sbr.rel (0) target = $region29
    $region28: #{network_forward.1} parent=1 // pred_region
      %1942 = dma.done [#allocation3], 128
    $region29: #{network_forward.1} parent=1 // pred_fallthru
      _
    %1943 = vsyncpa [#allocation3], 1

</llo_original>
